<compile_context>
chip_gen: v5e
topology: v5e:2x2
jax: 0.10.0
libtpu: 0.0.40
codegen_flags: <defaults>
</compile_context>

<pallas_src>
import functools

import jax
import jax.numpy as jnp
import numpy as np
from jax.experimental import pallas as pl
from jax.experimental.pallas import tpu as pltpu


def _round_up(x, m):
    return (x + m - 1) // m * m


def _vmem_limit_bytes():
    # Generation-aware VMEM budget: ~48 MiB on v7x (64 MiB physical),
    # up to ~100 MiB on v5e/v6e (128 MiB physical).
    try:
        cap = int(pltpu.get_tpu_info().vmem_capacity_bytes)
    except Exception:
        cap = 64 * 1024 * 1024
    return int(min(max(cap - 16 * 1024 * 1024, 32 * 1024 * 1024),
                   100 * 1024 * 1024))


# --------------------------------------------------------------------------
# pass 1: dilated conv (K accumulating MXU matmuls, halo from next block)
#         + per-channel GroupNorm statistics (resident accumulator over T)
# --------------------------------------------------------------------------
def _conv_stats_kernel(x_ref, xn_ref, w_ref, conv_ref, stats_ref, *,
                       k_taps, dilation, t_out):
    # x_ref    : (1, C_in, tt)      bf16  current time block of padded input
    # xn_ref   : (1, C_in, tt)      bf16  next time block (dilation halo)
    # w_ref    : (K, C_out, C_in)   bf16  conv weight, one tap per index
    # conv_ref : (1, C_out, tt)     bf16  conv output tile
    # stats_ref: (1, C_out, 2)      f32   [sum, sumsq], resident across T
    ti = pl.program_id(1)
    tt = x_ref.shape[2]
    halo = (k_taps - 1) * dilation

    cur = x_ref[0]                                              # (C_in, tt)
    if halo > 0:
        win = jnp.concatenate([cur, xn_ref[0][:, :halo]], axis=1)
    else:
        win = cur                                               # (C_in, tt+halo)

    acc = jnp.dot(w_ref[0], win[:, 0:tt],
                  preferred_element_type=jnp.float32)           # (C_out, tt)
    for k in range(1, k_taps):
        tap = win[:, k * dilation:k * dilation + tt]
        acc = acc + jnp.dot(w_ref[k], tap,
                            preferred_element_type=jnp.float32)

    conv_bf = acc.astype(conv_ref.dtype)
    conv_ref[0] = conv_bf

    # GN stats from the same bf16-rounded values that are normalized later;
    # mask time columns beyond T_out (they are NOT zero with the halo'd conv).
    h = conv_bf.astype(jnp.float32)
    tidx = ti * tt + jax.lax.broadcasted_iota(jnp.int32, h.shape, 1)
    h = jnp.where(tidx < t_out, h, 0.0)
    new = jnp.concatenate(
        [jnp.sum(h, axis=1, keepdims=True),
         jnp.sum(h * h, axis=1, keepdims=True)], axis=1)        # (C_out, 2)

    @pl.when(ti == 0)
    def _():
        stats_ref[0] = new

    @pl.when(ti > 0)
    def _():
        stats_ref[0] = stats_ref[0] + new


# --------------------------------------------------------------------------
# pass 2: GN affine + ReLU, accumulate SE time-sum (masking padded columns)
# --------------------------------------------------------------------------
def _hsum_kernel(conv_ref, aff_ref, hsum_ref, *, t_out):
    ti = pl.program_id(1)
    tt = conv_ref.shape[2]
    conv = conv_ref[0].astype(jnp.float32)                      # (C_out, tt)
    aff = aff_ref[0]                                            # (C_out, 2)
    h = jnp.maximum(conv * aff[:, 0:1] + aff[:, 1:2], 0.0)
    tidx = ti * tt + jax.lax.broadcasted_iota(jnp.int32, h.shape, 1)
    h = jnp.where(tidx < t_out, h, 0.0)
    s = jnp.sum(h, axis=1, keepdims=True)                       # (C_out, 1)

    @pl.when(ti == 0)
    def _():
        hsum_ref[0] = s

    @pl.when(ti > 0)
    def _():
        hsum_ref[0] = hsum_ref[0] + s


# --------------------------------------------------------------------------
# pass 3: fused (gate * GN) affine + ReLU (+ residual), unpadded store
# --------------------------------------------------------------------------
def _apply_kernel(*refs, residual):
    if residual:
        conv_ref, aff_ref, xres_ref, out_ref = refs
    else:
        conv_ref, aff_ref, out_ref = refs
    conv = conv_ref[0].astype(jnp.float32)                      # (C_out, tt)
    aff = aff_ref[0]                                            # (C_out, 2)
    h = jnp.maximum(conv * aff[:, 0:1] + aff[:, 1:2], 0.0)
    if residual:
        h = h + xres_ref[0].astype(jnp.float32)
    out_ref[0] = h.astype(out_ref.dtype)


# --------------------------------------------------------------------------
# wrapper
# --------------------------------------------------------------------------
@functools.partial(
    jax.jit,
    static_argnames=("kernel_size", "dilation", "num_groups", "eps", "t_tile"))
def se_conv1d(x, params, *, kernel_size, dilation, num_groups=8, eps=1e-5,
              t_tile=1024):
    B, C_in, T = x.shape
    w = params["tdnn_w"]                                        # (C_out, C_in, K)
    C_out = w.shape[0]
    K = kernel_size
    d = dilation
    pad = (K - 1) * d // 2
    halo = (K - 1) * d
    T_out = T + 2 * pad - halo
    residual = (C_in == C_out) and (T_out == T)
    cpg = C_out // num_groups

    # time tiling (lane-dense blocks; tile must cover the dilation halo)
    tt = _round_up(min(t_tile, _round_up(T_out, 128)), 128)
    if halo > tt:
        tt = _round_up(halo, 128)
    Tp = _round_up(T_out, tt)
    nT = Tp // tt

    mxu_dtype = jnp.bfloat16
    f32 = jnp.float32
    vmem = _vmem_limit_bytes()

    # Padded input: `pad` zeros on the left; right-padded so that nT+1 full
    # time blocks exist (the halo of the last tile reads from block nT).
    x_len = (nT + 1) * tt
    x_pad = jnp.pad(x, ((0, 0), (0, 0),
                        (pad, x_len - pad - T))).astype(mxu_dtype)
    w_taps = jnp.transpose(w, (2, 0, 1)).astype(mxu_dtype)      # (K, C_out, C_in)

    # ---- pass 1: conv + GN stats ----
    conv_cost = pl.CostEstimate(
        flops=int(2 * B * C_out * C_in * K * Tp),
        transcendentals=0,
        bytes_accessed=int(2 * B * C_in * Tp * 2 + K * C_out * C_in * 2
                           + B * C_out * Tp * 2 + B * C_out * 2 * 4))
    conv_out, stats = pl.pallas_call(
        functools.partial(_conv_stats_kernel, k_taps=K, dilation=d,
                          t_out=T_out),
        out_shape=(jax.ShapeDtypeStruct((B, C_out, Tp), mxu_dtype),
                   jax.ShapeDtypeStruct((B, C_out, 2), f32)),
        grid=(B, nT),
        in_specs=[
            pl.BlockSpec((1, C_in, tt), lambda b, t: (b, 0, t)),
            pl.BlockSpec((1, C_in, tt), lambda b, t: (b, 0, t + 1)),
            pl.BlockSpec((K, C_out, C_in), lambda b, t: (0, 0, 0)),
        ],
        out_specs=(
            pl.BlockSpec((1, C_out, tt), lambda b, t: (b, 0, t)),
            pl.BlockSpec((1, C_out, 2), lambda b, t: (b, 0, 0)),
        ),
        compiler_params=pltpu.CompilerParams(
            dimension_semantics=("parallel", "arbitrary"),
            vmem_limit_bytes=vmem),
        cost_estimate=conv_cost,
    )(x_pad, x_pad, w_taps)

    # ---- glue: GroupNorm scale/shift (tiny, per (batch, channel)) ----
    ch = jnp.arange(C_out)
    gmap = ((ch[None, :] // cpg)
            == jnp.arange(num_groups)[:, None]).astype(f32)     # (G, C_out)
    n = float(cpg * T_out)
    sum_c, sumsq_c = stats[:, :, 0], stats[:, :, 1]             # (B, C_out)
    mean_g = (sum_c @ gmap.T) / n                               # (B, G)
    var_g = jnp.maximum((sumsq_c @ gmap.T) / n - mean_g * mean_g, 0.0)
    mean_c = mean_g @ gmap                                      # (B, C_out)
    var_c = var_g @ gmap
    gamma = params["gn_gamma"].astype(f32)
    beta = params["gn_beta"].astype(f32)
    scale_c = gamma[None, :] * jax.lax.rsqrt(var_c + eps)
    shift_c = beta[None, :] - mean_c * scale_c
    affine = jnp.stack([scale_c, shift_c], axis=-1)             # (B, C_out, 2)

    # ---- pass 2: time-sum of relu(GN(conv)) for the SE squeeze ----
    ew_cost = pl.CostEstimate(
        flops=int(5 * B * C_out * Tp), transcendentals=0,
        bytes_accessed=int(B * C_out * Tp * 2 + B * C_out * 2 * 4
                           + B * C_out * 4))
    hsum = pl.pallas_call(
        functools.partial(_hsum_kernel, t_out=T_out),
        out_shape=jax.ShapeDtypeStruct((B, C_out, 1), f32),
        grid=(B, nT),
        in_specs=[
            pl.BlockSpec((1, C_out, tt), lambda b, t: (b, 0, t)),
            pl.BlockSpec((1, C_out, 2), lambda b, t: (b, 0, 0)),
        ],
        out_specs=pl.BlockSpec((1, C_out, 1), lambda b, t: (b, 0, 0)),
        compiler_params=pltpu.CompilerParams(
            dimension_semantics=("parallel", "arbitrary"),
            vmem_limit_bytes=vmem),
        cost_estimate=ew_cost,
    )(conv_out, affine)

    # ---- glue: SE bottleneck -> sigmoid gate, folded into the affine ----
    hmean = hsum[:, :, 0] / T_out                               # (B, C_out)
    w1 = params["fc1_w"][:, :, 0].astype(f32)
    w2 = params["fc2_w"][:, :, 0].astype(f32)
    z1 = jnp.maximum(hmean @ w1.T + params["fc1_b"].astype(f32)[None, :], 0.0)
    gate = jax.nn.sigmoid(z1 @ w2.T + params["fc2_b"].astype(f32)[None, :])
    # gate > 0, so gate * relu(s*x + b) == relu((gate*s)*x + gate*b)
    affine2 = affine * gate[:, :, None]                         # (B, C_out, 2)

    # ---- pass 3: fused affine + ReLU (+ residual), unpadded output ----
    apply_inputs = [conv_out, affine2]
    in_specs = [
        pl.BlockSpec((1, C_out, tt), lambda b, t: (b, 0, t)),
        pl.BlockSpec((1, C_out, 2), lambda b, t: (b, 0, 0)),
    ]
    if residual:
        apply_inputs.append(x)      # read directly; no padded HBM copy
        in_specs.append(pl.BlockSpec((1, C_in, tt), lambda b, t: (b, 0, t)))

    out_cost = pl.CostEstimate(
        flops=int((4 + int(residual)) * B * C_out * Tp), transcendentals=0,
        bytes_accessed=int(B * C_out * Tp * 2 + B * C_out * 2 * 4
                           + int(residual) * B * C_in * T * 4
                           + B * C_out * T_out * 4))
    out = pl.pallas_call(
        functools.partial(_apply_kernel, residual=residual),
        out_shape=jax.ShapeDtypeStruct((B, C_out, T_out), x.dtype),
        grid=(B, nT),
        in_specs=in_specs,
        out_specs=pl.BlockSpec((1, C_out, tt), lambda b, t: (b, 0, t)),
        compiler_params=pltpu.CompilerParams(
            dimension_semantics=("parallel", "parallel"),
            vmem_limit_bytes=vmem),
        cost_estimate=out_cost,
    )(*apply_inputs)

    return out


# --------------------------------------------------------------------------
# pure-JAX reference mirroring the PyTorch forward (eval mode)
# --------------------------------------------------------------------------
def ref_se_conv1d(x, params, *, kernel_size, dilation, num_groups=8, eps=1e-5):
    pad = (kernel_size - 1) * dilation // 2
    out = jax.lax.conv_general_dilated(
        x, params["tdnn_w"], window_strides=(1,), padding=[(pad, pad)],
        rhs_dilation=(dilation,), dimension_numbers=("NCH", "OIH", "NCH"))
    B, C, T = out.shape
    g = out.reshape(B, num_groups, C // num_groups, T)
    mean = g.mean(axis=(2, 3), keepdims=True)
    var = g.var(axis=(2, 3), keepdims=True)
    gn = (g - mean) / jnp.sqrt(var + eps)
    gn = gn.reshape(B, C, T) * params["gn_gamma"][None, :, None] \
        + params["gn_beta"][None, :, None]
    h = jnp.maximum(gn, 0.0)
    y = h.mean(axis=2, keepdims=True)
    w1 = params["fc1_w"][:, :, 0]
    w2 = params["fc2_w"][:, :, 0]
    z1 = jnp.maximum(jnp.einsum("rc,bct->brt", w1, y)
                     + params["fc1_b"][None, :, None], 0.0)
    z2 = jnp.einsum("cr,brt->bct", w2, z1) + params["fc2_b"][None, :, None]
    out = h * jax.nn.sigmoid(z2)
    if x.shape[1] == C:
        out = out + x
    return out


if __name__ == "__main__":
    B, C_in, C_out, T = 2, 16, 16, 16
    kernel_size, dilation, reduction, num_groups = 3, 2, 8, 8
    C_red = C_out // reduction

    key = jax.random.PRNGKey(0)
    k1, k2, k3, k4, k5, k6 = jax.random.split(key, 6)
    params = {
        "tdnn_w": 0.1 * jax.random.normal(k1, (C_out, C_in, kernel_size),
                                          jnp.float32),
        "gn_gamma": jnp.ones((C_out,), jnp.float32),
        "gn_beta": jnp.zeros((C_out,), jnp.float32),
        "fc1_w": 0.1 * jax.random.normal(k2, (C_red, C_out, 1), jnp.float32),
        "fc1_b": 0.1 * jax.random.normal(k3, (C_red,), jnp.float32),
        "fc2_w": 0.1 * jax.random.normal(k4, (C_out, C_red, 1), jnp.float32),
        "fc2_b": 0.1 * jax.random.normal(k5, (C_out,), jnp.float32),
    }
    x = jax.random.normal(k6, (B, C_in, T), jnp.float32)

    out = se_conv1d(x, params, kernel_size=kernel_size, dilation=dilation,
                    num_groups=num_groups)
    out = jax.block_until_ready(out)

    ref = ref_se_conv1d(x, params, kernel_size=kernel_size, dilation=dilation,
                        num_groups=num_groups)
    # bf16 MXU inputs (f32 accumulation) -> looser tolerance vs the f32 reference
    np.testing.assert_allclose(np.asarray(out), np.asarray(ref),
                               rtol=2e-2, atol=2e-2)
    print("KERNEL_OK")
</pallas_src>

<mosaic_0001>
module attributes {stable_mosaic.version = 11 : i64} {
  func.func @_conv_stats_kernel(%arg0: i32, %arg1: i32, %arg2: memref<1x16x128xbf16, #tpu.memory_space<vmem>>, %arg3: memref<1x16x128xbf16, #tpu.memory_space<vmem>>, %arg4: memref<3x16x16xbf16, #tpu.memory_space<vmem>>, %arg5: memref<1x16x128xbf16, #tpu.memory_space<vmem>>, %arg6: memref<1x16x2xf32, #tpu.memory_space<vmem>>) attributes {dimension_semantics = [#tpu.dimension_semantics<parallel>, #tpu.dimension_semantics<arbitrary>], iteration_bounds = array<i64: 2, 1>, scalar_prefetch = 0 : i64, scratch_operands = 0 : i64, tpu.core_type = #tpu.core_type<tc>, window_params = [{transform_indices = @transform_0, window_bounds = array<i64: 1, 16, 128>}, {transform_indices = @transform_1, window_bounds = array<i64: 1, 16, 128>}, {pipeline_mode = #tpu.pipeline_mode<synchronous>, transform_indices = @transform_2, window_bounds = array<i64: 3, 16, 16>}, {transform_indices = @transform_3, window_bounds = array<i64: 1, 16, 128>}, {transform_indices = @transform_4, window_bounds = array<i64: 1, 16, 2>}]} {
    %c0 = arith.constant 0 : index
    %c0_0 = arith.constant 0 : index
    %c0_1 = arith.constant 0 : index
    %0 = vector.load %arg2[%c0, %c0_0, %c0_1] : memref<1x16x128xbf16, #tpu.memory_space<vmem>>, vector<1x16x128xbf16>
    %1 = vector.shape_cast %0 : vector<1x16x128xbf16> to vector<16x128xbf16>
    %c0_2 = arith.constant 0 : index
    %c0_3 = arith.constant 0 : index
    %c0_4 = arith.constant 0 : index
    %2 = vector.load %arg3[%c0_2, %c0_3, %c0_4] : memref<1x16x128xbf16, #tpu.memory_space<vmem>>, vector<1x16x128xbf16>
    %3 = vector.shape_cast %2 : vector<1x16x128xbf16> to vector<16x128xbf16>
    %4 = vector.extract_strided_slice %3 {offsets = [0, 0], sizes = [16, 4], strides = [1, 1]} : vector<16x128xbf16> to vector<16x4xbf16>
    %5 = tpu.concatenate %1, %4 in 1 : vector<16x128xbf16>, vector<16x4xbf16> -> vector<16x132xbf16>
    %c0_5 = arith.constant 0 : index
    %c0_6 = arith.constant 0 : index
    %c0_7 = arith.constant 0 : index
    %6 = vector.load %arg4[%c0_5, %c0_6, %c0_7] : memref<3x16x16xbf16, #tpu.memory_space<vmem>>, vector<1x16x16xbf16>
    %7 = vector.shape_cast %6 : vector<1x16x16xbf16> to vector<16x16xbf16>
    %8 = vector.extract_strided_slice %5 {offsets = [0, 0], sizes = [16, 128], strides = [1, 1]} : vector<16x132xbf16> to vector<16x128xbf16>
    %cst = arith.constant dense<0.000000e+00> : vector<16x128xf32>
    %9 = tpu.matmul %7, %8, %cst {dimension_numbers = #tpu.dot_dimension_numbers<[1], [0], [0], [1], [0, 0, 1, 1], [], []>} : vector<16x16xbf16>, vector<16x128xbf16>, vector<16x128xf32> -> vector<16x128xf32>
    %10 = vector.extract_strided_slice %5 {offsets = [0, 2], sizes = [16, 128], strides = [1, 1]} : vector<16x132xbf16> to vector<16x128xbf16>
    %c1 = arith.constant 1 : index
    %c0_8 = arith.constant 0 : index
    %c0_9 = arith.constant 0 : index
    %11 = vector.load %arg4[%c1, %c0_8, %c0_9] : memref<3x16x16xbf16, #tpu.memory_space<vmem>>, vector<1x16x16xbf16>
    %12 = vector.shape_cast %11 : vector<1x16x16xbf16> to vector<16x16xbf16>
    %cst_10 = arith.constant dense<0.000000e+00> : vector<16x128xf32>
    %13 = tpu.matmul %12, %10, %cst_10 {dimension_numbers = #tpu.dot_dimension_numbers<[1], [0], [0], [1], [0, 0, 1, 1], [], []>} : vector<16x16xbf16>, vector<16x128xbf16>, vector<16x128xf32> -> vector<16x128xf32>
    %14 = arith.addf %9, %13 : vector<16x128xf32>
    %15 = vector.extract_strided_slice %5 {offsets = [0, 4], sizes = [16, 128], strides = [1, 1]} : vector<16x132xbf16> to vector<16x128xbf16>
    %c2 = arith.constant 2 : index
    %c0_11 = arith.constant 0 : index
    %c0_12 = arith.constant 0 : index
    %16 = vector.load %arg4[%c2, %c0_11, %c0_12] : memref<3x16x16xbf16, #tpu.memory_space<vmem>>, vector<1x16x16xbf16>
    %17 = vector.shape_cast %16 : vector<1x16x16xbf16> to vector<16x16xbf16>
    %cst_13 = arith.constant dense<0.000000e+00> : vector<16x128xf32>
    %18 = tpu.matmul %17, %15, %cst_13 {dimension_numbers = #tpu.dot_dimension_numbers<[1], [0], [0], [1], [0, 0, 1, 1], [], []>} : vector<16x16xbf16>, vector<16x128xbf16>, vector<16x128xf32> -> vector<16x128xf32>
    %19 = arith.addf %14, %18 : vector<16x128xf32>
    %20 = arith.truncf %19 : vector<16x128xf32> to vector<16x128xbf16>
    %c0_14 = arith.constant 0 : index
    %c0_15 = arith.constant 0 : index
    %c0_16 = arith.constant 0 : index
    %21 = vector.load %arg5[%c0_14, %c0_15, %c0_16] : memref<1x16x128xbf16, #tpu.memory_space<vmem>>, vector<1x16x128xbf16>
    %22 = vector.shape_cast %21 : vector<1x16x128xbf16> to vector<16x128xbf16>
    %23 = vector.shape_cast %20 : vector<16x128xbf16> to vector<1x16x128xbf16>
    tpu.vector_store %arg5[%c0_14, %c0_15, %c0_16], %23 {strides = array<i32>} : memref<1x16x128xbf16, #tpu.memory_space<vmem>>, vector<1x16x128xbf16>,
    %24 = arith.extf %20 : vector<16x128xbf16> to vector<16x128xf32>
    %c128_i32 = arith.constant 128 : i32
    %25 = arith.muli %arg1, %c128_i32 : i32
    %26 = tpu.iota {dimensions = array<i32: 1>} : vector<16x128xi32>
    %27 = vector.broadcast %25 : i32 to vector<16x128xi32>
    %28 = arith.addi %27, %26 : vector<16x128xi32>
    %c16_i32 = arith.constant 16 : i32
    %29 = vector.broadcast %c16_i32 : i32 to vector<16x128xi32>
    %30 = arith.cmpi slt, %28, %29 : vector<16x128xi32>
    %cst_17 = arith.constant 0.000000e+00 : f32
    %31 = vector.broadcast %cst_17 : f32 to vector<16x128xf32>
    %32 = arith.select %30, %24, %31 : vector<16x128xi1>, vector<16x128xf32>
    %cst_18 = arith.constant dense<0.000000e+00> : vector<16xf32>
    %33 = vector.multi_reduction <add>, %32, %cst_18 [1] : vector<16x128xf32> to vector<16xf32>
    %34 = vector.shape_cast %33 : vector<16xf32> to vector<16x1xf32>
    %35 = arith.mulf %32, %32 : vector<16x128xf32>
    %cst_19 = arith.constant dense<0.000000e+00> : vector<16xf32>
    %36 = vector.multi_reduction <add>, %35, %cst_19 [1] : vector<16x128xf32> to vector<16xf32>
    %37 = vector.shape_cast %36 : vector<16xf32> to vector<16x1xf32>
    %38 = tpu.concatenate %34, %37 in 1 : vector<16x1xf32>, vector<16x1xf32> -> vector<16x2xf32>
    %c0_i32 = arith.constant 0 : i32
    %39 = arith.cmpi eq, %arg1, %c0_i32 : i32
    %40 = arith.extui %39 : i1 to i32
    %c0_i32_20 = arith.constant 0 : i32
    %41 = arith.cmpi ne, %40, %c0_i32_20 : i32
    scf.if %41 {
      %c0_23 = arith.constant 0 : index
      %c0_24 = arith.constant 0 : index
      %c0_25 = arith.constant 0 : index
      %45 = vector.load %arg6[%c0_23, %c0_24, %c0_25] : memref<1x16x2xf32, #tpu.memory_space<vmem>>, vector<1x16x2xf32>
      %46 = vector.shape_cast %45 : vector<1x16x2xf32> to vector<16x2xf32>
      %47 = vector.shape_cast %38 : vector<16x2xf32> to vector<1x16x2xf32>
      tpu.vector_store %arg6[%c0_23, %c0_24, %c0_25], %47 {strides = array<i32>} : memref<1x16x2xf32, #tpu.memory_space<vmem>>, vector<1x16x2xf32>,
    } else {
    }
    %c0_i32_21 = arith.constant 0 : i32
    %42 = arith.cmpi sgt, %arg1, %c0_i32_21 : i32
    %43 = arith.extui %42 : i1 to i32
    %c0_i32_22 = arith.constant 0 : i32
    %44 = arith.cmpi ne, %43, %c0_i32_22 : i32
    scf.if %44 {
      %c0_23 = arith.constant 0 : index
      %c0_24 = arith.constant 0 : index
      %c0_25 = arith.constant 0 : index
      %45 = vector.load %arg6[%c0_23, %c0_24, %c0_25] : memref<1x16x2xf32, #tpu.memory_space<vmem>>, vector<1x16x2xf32>
      %46 = vector.shape_cast %45 : vector<1x16x2xf32> to vector<16x2xf32>
      %47 = arith.addf %46, %38 : vector<16x2xf32>
      %c0_26 = arith.constant 0 : index
      %c0_27 = arith.constant 0 : index
      %c0_28 = arith.constant 0 : index
      %48 = vector.load %arg6[%c0_26, %c0_27, %c0_28] : memref<1x16x2xf32, #tpu.memory_space<vmem>>, vector<1x16x2xf32>
      %49 = vector.shape_cast %48 : vector<1x16x2xf32> to vector<16x2xf32>
      %50 = vector.shape_cast %47 : vector<16x2xf32> to vector<1x16x2xf32>
      tpu.vector_store %arg6[%c0_26, %c0_27, %c0_28], %50 {strides = array<i32>} : memref<1x16x2xf32, #tpu.memory_space<vmem>>, vector<1x16x2xf32>,
    } else {
    }
    return
  }
  func.func @transform_0(%arg0: i32, %arg1: i32) -> (i32, i32, i32) {
    %c0_i32 = arith.constant 0 : i32
    %c0_i32_0 = arith.constant 0 : i32
    return %arg0, %c0_i32, %arg1 : i32, i32, i32
  }
  func.func @transform_1(%arg0: i32, %arg1: i32) -> (i32, i32, i32) {
    %c1_i32 = arith.constant 1 : i32
    %0 = arith.addi %arg1, %c1_i32 : i32
    %c0_i32 = arith.constant 0 : i32
    %c0_i32_0 = arith.constant 0 : i32
    return %arg0, %c0_i32, %0 : i32, i32, i32
  }
  func.func @transform_2(%arg0: i32, %arg1: i32) -> (i32, i32, i32) {
    %c0_i32 = arith.constant 0 : i32
    %c0_i32_0 = arith.constant 0 : i32
    %c0_i32_1 = arith.constant 0 : i32
    %c0_i32_2 = arith.constant 0 : i32
    return %c0_i32, %c0_i32_0, %c0_i32_1 : i32, i32, i32
  }
  func.func @transform_3(%arg0: i32, %arg1: i32) -> (i32, i32, i32) {
    %c0_i32 = arith.constant 0 : i32
    %c0_i32_0 = arith.constant 0 : i32
    return %arg0, %c0_i32, %arg1 : i32, i32, i32
  }
  func.func @transform_4(%arg0: i32, %arg1: i32) -> (i32, i32, i32) {
    %c0_i32 = arith.constant 0 : i32
    %c0_i32_0 = arith.constant 0 : i32
    %c0_i32_1 = arith.constant 0 : i32
    return %arg0, %c0_i32, %c0_i32_0 : i32, i32, i32
  }
}

module attributes {stable_mosaic.version = 11 : i64} {
  func.func @_hsum_kernel(%arg0: i32, %arg1: i32, %arg2: memref<1x16x128xbf16, #tpu.memory_space<vmem>>, %arg3: memref<1x16x2xf32, #tpu.memory_space<vmem>>, %arg4: memref<1x16x1xf32, #tpu.memory_space<vmem>>) attributes {dimension_semantics = [#tpu.dimension_semantics<parallel>, #tpu.dimension_semantics<arbitrary>], iteration_bounds = array<i64: 2, 1>, scalar_prefetch = 0 : i64, scratch_operands = 0 : i64, tpu.core_type = #tpu.core_type<tc>, window_params = [{transform_indices = @transform_0, window_bounds = array<i64: 1, 16, 128>}, {transform_indices = @transform_1, window_bounds = array<i64: 1, 16, 2>}, {transform_indices = @transform_2, window_bounds = array<i64: 1, 16, 1>}]} {
    %c0 = arith.constant 0 : index
    %c0_0 = arith.constant 0 : index
    %c0_1 = arith.constant 0 : index
    %0 = vector.load %arg2[%c0, %c0_0, %c0_1] : memref<1x16x128xbf16, #tpu.memory_space<vmem>>, vector<1x16x128xbf16>
    %1 = vector.shape_cast %0 : vector<1x16x128xbf16> to vector<16x128xbf16>
    %2 = arith.extf %1 : vector<16x128xbf16> to vector<16x128xf32>
    %c0_2 = arith.constant 0 : index
    %c0_3 = arith.constant 0 : index
    %c0_4 = arith.constant 0 : index
    %3 = vector.load %arg3[%c0_2, %c0_3, %c0_4] : memref<1x16x2xf32, #tpu.memory_space<vmem>>, vector<1x16x2xf32>
    %4 = vector.shape_cast %3 : vector<1x16x2xf32> to vector<16x2xf32>
    %5 = vector.extract_strided_slice %4 {offsets = [0, 0], sizes = [16, 1], strides = [1, 1]} : vector<16x2xf32> to vector<16x1xf32>
    %6 = vector.broadcast %5 : vector<16x1xf32> to vector<16x128xf32>
    %7 = arith.mulf %2, %6 : vector<16x128xf32>
    %8 = vector.extract_strided_slice %4 {offsets = [0, 1], sizes = [16, 1], strides = [1, 1]} : vector<16x2xf32> to vector<16x1xf32>
    %9 = vector.broadcast %8 : vector<16x1xf32> to vector<16x128xf32>
    %10 = arith.addf %7, %9 : vector<16x128xf32>
    %cst = arith.constant 0.000000e+00 : f32
    %11 = vector.broadcast %cst : f32 to vector<16x128xf32>
    %12 = arith.maximumf %10, %11 : vector<16x128xf32>
    %c128_i32 = arith.constant 128 : i32
    %13 = arith.muli %arg1, %c128_i32 : i32
    %14 = tpu.iota {dimensions = array<i32: 1>} : vector<16x128xi32>
    %15 = vector.broadcast %13 : i32 to vector<16x128xi32>
    %16 = arith.addi %15, %14 : vector<16x128xi32>
    %c16_i32 = arith.constant 16 : i32
    %17 = vector.broadcast %c16_i32 : i32 to vector<16x128xi32>
    %18 = arith.cmpi slt, %16, %17 : vector<16x128xi32>
    %cst_5 = arith.constant 0.000000e+00 : f32
    %19 = vector.broadcast %cst_5 : f32 to vector<16x128xf32>
    %20 = arith.select %18, %12, %19 : vector<16x128xi1>, vector<16x128xf32>
    %cst_6 = arith.constant dense<0.000000e+00> : vector<16xf32>
    %21 = vector.multi_reduction <add>, %20, %cst_6 [1] : vector<16x128xf32> to vector<16xf32>
    %22 = vector.shape_cast %21 : vector<16xf32> to vector<16x1xf32>
    %c0_i32 = arith.constant 0 : i32
    %23 = arith.cmpi eq, %arg1, %c0_i32 : i32
    %24 = arith.extui %23 : i1 to i32
    %c0_i32_7 = arith.constant 0 : i32
    %25 = arith.cmpi ne, %24, %c0_i32_7 : i32
    scf.if %25 {
      %c0_10 = arith.constant 0 : index
      %c0_11 = arith.constant 0 : index
      %c0_12 = arith.constant 0 : index
      %29 = vector.load %arg4[%c0_10, %c0_11, %c0_12] : memref<1x16x1xf32, #tpu.memory_space<vmem>>, vector<1x16x1xf32>
      %30 = vector.shape_cast %29 : vector<1x16x1xf32> to vector<16x1xf32>
      %31 = vector.shape_cast %22 : vector<16x1xf32> to vector<1x16x1xf32>
      tpu.vector_store %arg4[%c0_10, %c0_11, %c0_12], %31 {strides = array<i32>} : memref<1x16x1xf32, #tpu.memory_space<vmem>>, vector<1x16x1xf32>,
    } else {
    }
    %c0_i32_8 = arith.constant 0 : i32
    %26 = arith.cmpi sgt, %arg1, %c0_i32_8 : i32
    %27 = arith.extui %26 : i1 to i32
    %c0_i32_9 = arith.constant 0 : i32
    %28 = arith.cmpi ne, %27, %c0_i32_9 : i32
    scf.if %28 {
      %c0_10 = arith.constant 0 : index
      %c0_11 = arith.constant 0 : index
      %c0_12 = arith.constant 0 : index
      %29 = vector.load %arg4[%c0_10, %c0_11, %c0_12] : memref<1x16x1xf32, #tpu.memory_space<vmem>>, vector<1x16x1xf32>
      %30 = vector.shape_cast %29 : vector<1x16x1xf32> to vector<16x1xf32>
      %31 = arith.addf %30, %22 : vector<16x1xf32>
      %c0_13 = arith.constant 0 : index
      %c0_14 = arith.constant 0 : index
      %c0_15 = arith.constant 0 : index
      %32 = vector.load %arg4[%c0_13, %c0_14, %c0_15] : memref<1x16x1xf32, #tpu.memory_space<vmem>>, vector<1x16x1xf32>
      %33 = vector.shape_cast %32 : vector<1x16x1xf32> to vector<16x1xf32>
      %34 = vector.shape_cast %31 : vector<16x1xf32> to vector<1x16x1xf32>
      tpu.vector_store %arg4[%c0_13, %c0_14, %c0_15], %34 {strides = array<i32>} : memref<1x16x1xf32, #tpu.memory_space<vmem>>, vector<1x16x1xf32>,
    } else {
    }
    return
  }
  func.func @transform_0(%arg0: i32, %arg1: i32) -> (i32, i32, i32) {
    %c0_i32 = arith.constant 0 : i32
    %c0_i32_0 = arith.constant 0 : i32
    return %arg0, %c0_i32, %arg1 : i32, i32, i32
  }
  func.func @transform_1(%arg0: i32, %arg1: i32) -> (i32, i32, i32) {
    %c0_i32 = arith.constant 0 : i32
    %c0_i32_0 = arith.constant 0 : i32
    %c0_i32_1 = arith.constant 0 : i32
    return %arg0, %c0_i32, %c0_i32_0 : i32, i32, i32
  }
  func.func @transform_2(%arg0: i32, %arg1: i32) -> (i32, i32, i32) {
    %c0_i32 = arith.constant 0 : i32
    %c0_i32_0 = arith.constant 0 : i32
    %c0_i32_1 = arith.constant 0 : i32
    return %arg0, %c0_i32, %c0_i32_0 : i32, i32, i32
  }
}

module attributes {stable_mosaic.version = 11 : i64} {
  func.func @_apply_kernel(%arg0: i32, %arg1: i32, %arg2: memref<1x16x128xbf16, #tpu.memory_space<vmem>>, %arg3: memref<1x16x2xf32, #tpu.memory_space<vmem>>, %arg4: memref<1x16x128xf32, #tpu.memory_space<vmem>>, %arg5: memref<1x16x128xf32, #tpu.memory_space<vmem>>) attributes {dimension_semantics = [#tpu.dimension_semantics<parallel>, #tpu.dimension_semantics<parallel>], iteration_bounds = array<i64: 2, 1>, scalar_prefetch = 0 : i64, scratch_operands = 0 : i64, tpu.core_type = #tpu.core_type<tc>, window_params = [{transform_indices = @transform_0, window_bounds = array<i64: 1, 16, 128>}, {transform_indices = @transform_1, window_bounds = array<i64: 1, 16, 2>}, {transform_indices = @transform_2, window_bounds = array<i64: 1, 16, 128>}, {transform_indices = @transform_3, window_bounds = array<i64: 1, 16, 128>}]} {
    %c0 = arith.constant 0 : index
    %c0_0 = arith.constant 0 : index
    %c0_1 = arith.constant 0 : index
    %0 = vector.load %arg2[%c0, %c0_0, %c0_1] : memref<1x16x128xbf16, #tpu.memory_space<vmem>>, vector<1x16x128xbf16>
    %1 = vector.shape_cast %0 : vector<1x16x128xbf16> to vector<16x128xbf16>
    %2 = arith.extf %1 : vector<16x128xbf16> to vector<16x128xf32>
    %c0_2 = arith.constant 0 : index
    %c0_3 = arith.constant 0 : index
    %c0_4 = arith.constant 0 : index
    %3 = vector.load %arg3[%c0_2, %c0_3, %c0_4] : memref<1x16x2xf32, #tpu.memory_space<vmem>>, vector<1x16x2xf32>
    %4 = vector.shape_cast %3 : vector<1x16x2xf32> to vector<16x2xf32>
    %5 = vector.extract_strided_slice %4 {offsets = [0, 0], sizes = [16, 1], strides = [1, 1]} : vector<16x2xf32> to vector<16x1xf32>
    %6 = vector.broadcast %5 : vector<16x1xf32> to vector<16x128xf32>
    %7 = arith.mulf %2, %6 : vector<16x128xf32>
    %8 = vector.extract_strided_slice %4 {offsets = [0, 1], sizes = [16, 1], strides = [1, 1]} : vector<16x2xf32> to vector<16x1xf32>
    %9 = vector.broadcast %8 : vector<16x1xf32> to vector<16x128xf32>
    %10 = arith.addf %7, %9 : vector<16x128xf32>
    %cst = arith.constant 0.000000e+00 : f32
    %11 = vector.broadcast %cst : f32 to vector<16x128xf32>
    %12 = arith.maximumf %10, %11 : vector<16x128xf32>
    %c0_5 = arith.constant 0 : index
    %c0_6 = arith.constant 0 : index
    %c0_7 = arith.constant 0 : index
    %13 = vector.load %arg4[%c0_5, %c0_6, %c0_7] : memref<1x16x128xf32, #tpu.memory_space<vmem>>, vector<1x16x128xf32>
    %14 = vector.shape_cast %13 : vector<1x16x128xf32> to vector<16x128xf32>
    %15 = arith.addf %12, %14 : vector<16x128xf32>
    %c0_8 = arith.constant 0 : index
    %c0_9 = arith.constant 0 : index
    %c0_10 = arith.constant 0 : index
    %16 = vector.load %arg5[%c0_8, %c0_9, %c0_10] : memref<1x16x128xf32, #tpu.memory_space<vmem>>, vector<1x16x128xf32>
    %17 = vector.shape_cast %16 : vector<1x16x128xf32> to vector<16x128xf32>
    %18 = vector.shape_cast %15 : vector<16x128xf32> to vector<1x16x128xf32>
    tpu.vector_store %arg5[%c0_8, %c0_9, %c0_10], %18 {strides = array<i32>} : memref<1x16x128xf32, #tpu.memory_space<vmem>>, vector<1x16x128xf32>,
    return
  }
  func.func @transform_0(%arg0: i32, %arg1: i32) -> (i32, i32, i32) {
    %c0_i32 = arith.constant 0 : i32
    %c0_i32_0 = arith.constant 0 : i32
    return %arg0, %c0_i32, %arg1 : i32, i32, i32
  }
  func.func @transform_1(%arg0: i32, %arg1: i32) -> (i32, i32, i32) {
    %c0_i32 = arith.constant 0 : i32
    %c0_i32_0 = arith.constant 0 : i32
    %c0_i32_1 = arith.constant 0 : i32
    return %arg0, %c0_i32, %c0_i32_0 : i32, i32, i32
  }
  func.func @transform_2(%arg0: i32, %arg1: i32) -> (i32, i32, i32) {
    %c0_i32 = arith.constant 0 : i32
    %c0_i32_0 = arith.constant 0 : i32
    return %arg0, %c0_i32, %arg1 : i32, i32, i32
  }
  func.func @transform_3(%arg0: i32, %arg1: i32) -> (i32, i32, i32) {
    %c0_i32 = arith.constant 0 : i32
    %c0_i32_0 = arith.constant 0 : i32
    return %arg0, %c0_i32, %arg1 : i32, i32, i32
  }
}

</mosaic_0001>

<llo_original>
// kernel: se_conv1d.4
$region0: #{se_conv1d.4}
  #allocation0 [shape = 'u32[]', space=smem, size = 0x4, offset = 0x4, fixed_abs, tag = 'smem constant byte address 0x4 - core index']
  #allocation1 [shape = 'u32[72,128]{1,0:T(1,128)}', space=vmem, size = 0x9000, scoped, tag = 'internal scratch']
  %s0 = inlined_call_operand.vmem [shape: bf16[2,16,128], index: 0, kind: input, shape index: {}]
  %s1 = inlined_call_operand.vmem [shape: f32[2,16,2], index: 1, kind: input, shape index: {}]
  %s2 = inlined_call_operand.vmem [shape: f32[2,16,1], index: 2, kind: output, shape index: {}]
  %s3 = sld [smem:[#allocation0]]
  $region49: #{se_conv1d.4} parent=0
    _
  %s5 = ssub.s32 1, %s3
  %s6 = scalar_select 0, %s5, %s3
  loop: start=0, step=1, limit=4
  $region2: #{se_conv1d.4} parent=0 // loop_pre_header
    _
  $region3: #{se_conv1d.4} parent=0 // loop_header
    %s8 = sphi 0, %s12
    %p9 = scmp.ge.s32.totalorder %s8, 4
    %s15 = sphi 0, %s27
    %s16 = sphi 0, %s23
    %s17 = sphi 0, %s15
    %s18 = sphi 0, %s16
    %s19 = sphi 0, %s17
    %s20 = sphi 0, %s18
    %s32 = sphi 0, %s34
    %s35 = sphi 0, %s32
    %s36 = sphi 0, %s35
    %s52 = sphi 0, %s36
    %s58 = sphi 0, %s60
    %s61 = sphi 0, %s58
    %s62 = sphi 0, %s61
    %s78 = sphi 0, %s62
    %s84 = sphi 0, %s86
    %s87 = sphi 0, %s84
    %s88 = sphi 0, %s87
    %s104 = sphi 0, %s88
  $region4: #{se_conv1d.4} parent=0 // loop_header_branch
    %11 = sbr.rel (%p9) target = $region8
  $region5: #{se_conv1d.4} parent=0 // loop_body
    %s13 = ssub.s32 %s8, 1
    %s14 = ssub.s32 %s8, 2
    %s21 = sadd.s32 1, %s16
    %p22 = scmp.ge.s32.totalorder %s21, 1
    %s23 = scalar_select %p22, 0, %s21
    %s24 = sadd.s32 1, %s15
    %s25 = scalar_select %p22, %s24, %s15
    %p26 = scmp.ge.s32.totalorder %s25, 2
    %s27 = scalar_select %p26, 0, %s25
    %s28 = ssub.s32 %s15, %s27
    %s29 = ssub.s32 %s16, %s23
    %s30 = sor.u32 %s28, %s29
    %p31 = scmp.eq.s32.totalorder %s30, 0
    %s33 = sadd.s32 %s32, 1
    %s34 = scalar_select %p31, %s32, %s33
    %p37 = pneg %p31
    %p38 = scmp.eq.s32.totalorder %s8, 1
    %p39 = por %p37, %p38
    %p40 = scmp.ne.s32.totalorder %s32, %s35
    %p41 = scmp.eq.s32.totalorder %s8, 0
    %p42 = por %p40, %p41
    %p43 = scmp.ne.s32.totalorder %s32, %s35
    %p44 = scmp.eq.s32.totalorder %s13, 1
    %p45 = por %p43, %p44
    %p46 = scmp.ne.s32.totalorder %s35, %s36
    %p47 = scmp.eq.s32.totalorder %s13, 0
    %p48 = por %p46, %p47
    %p49 = scmp.ne.s32.totalorder %s35, %s36
    %p50 = scmp.eq.s32.totalorder %s14, 1
    %p51 = por %p49, %p50
    %p53 = scmp.ne.s32.totalorder %s36, %s52
    %p54 = scmp.eq.s32.totalorder %s14, 0
    %p55 = por %p53, %p54
    %s56 = ssub.s32 %s15, %s27
    %p57 = scmp.eq.s32.totalorder %s56, 0
    %s59 = sadd.s32 %s58, 1
    %s60 = scalar_select %p57, %s58, %s59
    %p63 = pneg %p57
    %p64 = scmp.eq.s32.totalorder %s8, 1
    %p65 = por %p63, %p64
    %p66 = scmp.ne.s32.totalorder %s58, %s61
    %p67 = scmp.eq.s32.totalorder %s8, 0
    %p68 = por %p66, %p67
    %p69 = scmp.ne.s32.totalorder %s58, %s61
    %p70 = scmp.eq.s32.totalorder %s13, 1
    %p71 = por %p69, %p70
    %p72 = scmp.ne.s32.totalorder %s61, %s62
    %p73 = scmp.eq.s32.totalorder %s13, 0
    %p74 = por %p72, %p73
    %p75 = scmp.ne.s32.totalorder %s61, %s62
    %p76 = scmp.eq.s32.totalorder %s14, 1
    %p77 = por %p75, %p76
    %p79 = scmp.ne.s32.totalorder %s62, %s78
    %p80 = scmp.eq.s32.totalorder %s14, 0
    %p81 = por %p79, %p80
    %s82 = ssub.s32 %s15, %s27
    %p83 = scmp.eq.s32.totalorder %s82, 0
    %s85 = sadd.s32 %s84, 1
    %s86 = scalar_select %p83, %s84, %s85
    %p89 = pneg %p83
    %p90 = scmp.eq.s32.totalorder %s8, 1
    %p91 = por %p89, %p90
    %p92 = scmp.ne.s32.totalorder %s84, %s87
    %p93 = scmp.eq.s32.totalorder %s8, 0
    %p94 = por %p92, %p93
    %p95 = scmp.ne.s32.totalorder %s84, %s87
    %p96 = scmp.eq.s32.totalorder %s13, 1
    %p97 = por %p95, %p96
    %p98 = scmp.ne.s32.totalorder %s87, %s88
    %p99 = scmp.eq.s32.totalorder %s13, 0
    %p100 = por %p98, %p99
    %p101 = scmp.ne.s32.totalorder %s87, %s88
    %p102 = scmp.eq.s32.totalorder %s14, 1
    %p103 = por %p101, %p102
    %p105 = scmp.ne.s32.totalorder %s88, %s104
    %p106 = scmp.eq.s32.totalorder %s14, 0
    %p107 = por %p105, %p106
    %p108 = scmp.le.s32.totalorder 1, %s8
    %p109 = scmp.lt.s32.totalorder %s8, 3
    %p110 = pnand %p108, %p109
    %p111 = pneg %p110
    // Predicated region
    $region9: #{se_conv1d.4} parent=5 // pred_check
      _
    $region10: #{se_conv1d.4} parent=5 // pred_check_branch
      %113 = sbr.rel (%p110) target = $region12
    $region11: #{se_conv1d.4} parent=5 // pred_region
      %s114 = ssub.s32 %s8, 1
    $region12: #{se_conv1d.4} parent=5 // pred_fallthru
      _
    %p115 = scmp.lt.s32.totalorder %s8, 2
    // Predicated region
    $region13: #{se_conv1d.4} parent=5 // pred_check
      %p116 = pneg %p115
    $region14: #{se_conv1d.4} parent=5 // pred_check_branch
      %118 = sbr.rel (%p116) target = $region16
    $region15: #{se_conv1d.4} parent=5 // pred_region
      // Predicated region
      $region17: #{se_conv1d.4} parent=15 // pred_check
        %p119 = pneg %p42
      $region18: #{se_conv1d.4} parent=15 // pred_check_branch
        %121 = sbr.rel (%p119) target = $region20
      $region19: #{se_conv1d.4} parent=15 // pred_region
        %p122 = scmp.lt.s32.totalorder %s15, 1
        %s123 = scalar_select %p122, %s15, 1
        %p124 = scmp.lt.s32.totalorder %s16, 0
        %s125 = scalar_select %p124, %s16, 0
        %s126 = smul.addr %s123, 2
        %s127 = sadd.s32 %s125, %s126
        %s128 = smul.addr %s127, 4
        %s129 = scalar_lea.vmem %s0, %s128
      $region20: #{se_conv1d.4} parent=15 // pred_fallthru
        _
      // Predicated region
      $region21: #{se_conv1d.4} parent=15 // pred_check
        %p130 = pneg %p68
      $region22: #{se_conv1d.4} parent=15 // pred_check_branch
        %132 = sbr.rel (%p130) target = $region24
      $region23: #{se_conv1d.4} parent=15 // pred_region
        %p133 = scmp.lt.s32.totalorder %s15, 1
        %s134 = scalar_select %p133, %s15, 1
        %s135 = smul.addr %s134, 2
        %s136 = smul.addr %s135, 8
        %s137 = scalar_lea.vmem %s1, %s136
      $region24: #{se_conv1d.4} parent=15 // pred_fallthru
        _
    $region16: #{se_conv1d.4} parent=5 // pred_fallthru
      _
    %p138 = scmp.le.s32.totalorder 1, %s8
    %p139 = scmp.lt.s32.totalorder %s8, 3
    %p140 = pnand %p138, %p139
    %p141 = pneg %p140
    // Predicated region
    $region25: #{se_conv1d.4} parent=5 // pred_check
      _
    $region26: #{se_conv1d.4} parent=5 // pred_check_branch
      %143 = sbr.rel (%p140) target = $region28
    $region27: #{se_conv1d.4} parent=5 // pred_region
      %s144 = ssub.s32 %s8, 1
      %p145 = scmp.lt.s32.totalorder %s17, 1
      %s146 = scalar_select %p145, %s17, 1
      %p147 = scmp.lt.s32.totalorder %s18, 0
      %s148 = scalar_select %p147, %s18, 0
      %s149 = smul.addr %s146, 2
      %s150 = sadd.s32 %s148, %s149
      %s151 = smul.addr %s150, 4
      %s152 = scalar_lea.vmem %s0, %s151
      %p153 = pneg %p48
      %p154 = pneg %p45
      %p155 = scmp.lt.s32.totalorder %s17, 1
      %s156 = scalar_select %p155, %s17, 1
      %s157 = smul.addr %s156, 2
      %s158 = smul.addr %s157, 8
      %s159 = scalar_lea.vmem %s1, %s158
      %p160 = pneg %p74
      %p161 = pneg %p71
      %p162 = pneg %p100
      %p163 = pneg %p97
      %p164 = scmp.lt.s32.totalorder %s17, 1
      %s165 = scalar_select %p164, %s17, 1
      %s166 = smul.addr %s165, 2
      %s167 = smul.addr %s166, 8
      %s168 = scalar_lea.vmem %s2, %s167
      %p169 = scmp.lt.s32.totalorder %s17, 1
      %s170 = scalar_select %p169, %s17, 1
      %p171 = scmp.lt.s32.totalorder %s18, 0
      %s172 = scalar_select %p171, %s18, 0
      %s173 = smul.addr %s170, 2
      %s174 = sadd.s32 %s172, %s173
      %s175 = smul.addr %s174, 4
      %s176 = scalar_lea.vmem %s0, %s175
      %p177 = scmp.lt.s32.totalorder %s17, 1
      %s178 = scalar_select %p177, %s17, 1
      %s179 = smul.addr %s178, 2
      %s180 = smul.addr %s179, 8
      %s181 = scalar_lea.vmem %s1, %s180
      %p182 = scmp.lt.s32.totalorder %s17, 1
      %s183 = scalar_select %p182, %s17, 1
      %s184 = smul.addr %s183, 2
      %s185 = smul.addr %s184, 8
      %s186 = scalar_lea.vmem %s2, %s185
      %v187 = vld [vmem:[%s176] sm:$0xf]
      %v188 = vld [vmem:[%s176 + $0x4] sm:$0xf]
      %v189 = vunpack.c.l.bf16 %v187
      %v190 = vunpack.c.l.bf16 %v188
      %v191 = vld [vmem:[%s181] sm:$0xff]
      %v192 = vld [vmem:[%s181 + $0x8] sm:$0xff]
      %194 = vset.pattern.permute.xlu0 0
      %195 = vperm.xlu0 %194, %v191
      %v196 = vpop.permute.xlu0 %195
      %199 = vset.pattern.permute.xlu0 0
      %200 = vperm.xlu0 %199, %v192
      %v201 = vpop.permute.xlu0 %200
      %v203 = vmul.f32 %v189, %v196
      %v204 = vmul.f32 %v190, %v201
      %205 = vset.pattern.permute.xlu0 1
      %206 = vperm.xlu0 %205, %v191
      %v207 = vpop.permute.xlu0 %206
      %209 = vset.pattern.permute.xlu0 1
      %210 = vperm.xlu0 %209, %v192
      %v211 = vpop.permute.xlu0 %210
      %v213 = vadd.f32 %v203, %v207
      %v214 = vadd.f32 %v204, %v211
      %v215 = vmax.f32 %v213, 0.0
      %v216 = vmax.f32 %v214, 0.0
      %s217 = smul.u32 %s18, 128
      %v218 = vlaneseq
      %v219 = vand.u32 %v218, 127
      %v220 = vstv %s217
      %v221 = vadd.s32 %v220, %v219
      %vm222 = vcmp.lt.s32.totalorder %v221, 16
      %v223 = vsel %vm222, %v215, 0.0
      %v224 = vsel %vm222, %v216, 0.0
      %225 = vadd.xlane.f32.xlu0 %v223
      %v226 = vpop.xlane.xlu0 %225
      %227 = vadd.xlane.f32.xlu0 %v224
      %v228 = vpop.xlane.xlu0 %227
      %p229 = scmp.eq.s32.totalorder %s18, 0
      // Predicated region
      $region29: #{se_conv1d.4} parent=27 // pred_check
        %p230 = pneg %p229
      $region30: #{se_conv1d.4} parent=27 // pred_check_branch
        %232 = sbr.rel (%p230) target = $region32
      $region31: #{se_conv1d.4} parent=27 // pred_region
        %vm233 = vcmask 7168
        %234 = vst.msk [vmem:[%s186] sm:$0xff] %vm233, %v226
        %235 = vst.msk [vmem:[%s186 + $0x8] sm:$0xff] %vm233, %v228
      $region32: #{se_conv1d.4} parent=27 // pred_fallthru
        _
      %p236 = scmp.gt.s32.totalorder %s18, 0
      // Predicated region
      $region33: #{se_conv1d.4} parent=27 // pred_check
        %p237 = pneg %p236
      $region34: #{se_conv1d.4} parent=27 // pred_check_branch
        %239 = sbr.rel (%p237) target = $region36
      $region35: #{se_conv1d.4} parent=27 // pred_region
        %v240 = vld [vmem:[%s186] sm:$0xff]
        %v241 = vld [vmem:[%s186 + $0x8] sm:$0xff]
        %v242 = vadd.f32 %v240, %v226
        %v243 = vadd.f32 %v241, %v228
        %vm244 = vcmask 7168
        %245 = vst.msk [vmem:[%s186] sm:$0xff] %vm244, %v242
        %246 = vst.msk [vmem:[%s186 + $0x8] sm:$0xff] %vm244, %v243
      $region36: #{se_conv1d.4} parent=27 // pred_fallthru
        _
      %p247 = scmp.lt.s32.totalorder %s17, 1
      %s248 = scalar_select %p247, %s17, 1
      %s249 = smul.addr %s248, 2
      %s250 = smul.addr %s249, 8
      %s251 = scalar_lea.vmem %s2, %s250
      // Predicated region
      $region37: #{se_conv1d.4} parent=27 // pred_check
        %p252 = pneg %p97
      $region38: #{se_conv1d.4} parent=27 // pred_check_branch
        %254 = sbr.rel (%p252) target = $region40
      $region39: #{se_conv1d.4} parent=27 // pred_region
        _
      $region40: #{se_conv1d.4} parent=27 // pred_fallthru
        _
    $region28: #{se_conv1d.4} parent=5 // pred_fallthru
      _
    %p255 = scmp.le.s32.totalorder 2, %s8
    // Predicated region
    $region41: #{se_conv1d.4} parent=5 // pred_check
      %p256 = pneg %p255
    $region42: #{se_conv1d.4} parent=5 // pred_check_branch
      %258 = sbr.rel (%p256) target = $region44
    $region43: #{se_conv1d.4} parent=5 // pred_region
      %s259 = ssub.s32 %s8, 2
      // Predicated region
      $region45: #{se_conv1d.4} parent=43 // pred_check
        %p260 = pneg %p103
      $region46: #{se_conv1d.4} parent=43 // pred_check_branch
        %262 = sbr.rel (%p260) target = $region48
      $region47: #{se_conv1d.4} parent=43 // pred_region
        %p263 = scmp.lt.s32.totalorder %s19, 1
        %s264 = scalar_select %p263, %s19, 1
        %s265 = smul.addr %s264, 2
        %s266 = smul.addr %s265, 8
        %s267 = scalar_lea.vmem %s2, %s266
      $region48: #{se_conv1d.4} parent=43 // pred_fallthru
        _
    $region44: #{se_conv1d.4} parent=5 // pred_fallthru
      _
  $region6: #{se_conv1d.4} parent=0 // loop_footer
    %s12 = sadd.s32 1, %s8
  $region7: #{se_conv1d.4} parent=0 // loop_footer_branch
    %7 = sbr.rel target = $region3
  $region8: #{se_conv1d.4} parent=0 // loop_exit
    _

// kernel: se_conv1d.5
$region0: #{se_conv1d.5}
  #allocation0 [shape = 'u32[]', space=smem, size = 0x4, offset = 0x4, fixed_abs, tag = 'smem constant byte address 0x4 - core index']
  #allocation1 [shape = 'u32[72,128]{1,0:T(1,128)}', space=vmem, size = 0x9000, scoped, tag = 'internal scratch']
  %s0 = inlined_call_operand.vmem [shape: bf16[2,16,128], index: 0, kind: input, shape index: {}]
  %s1 = inlined_call_operand.vmem [shape: f32[2,16,2], index: 1, kind: input, shape index: {}]
  %s2 = inlined_call_operand.vmem [shape: f32[2,16,16], index: 2, kind: input, shape index: {}]
  %s3 = inlined_call_operand.hbm [shape: f32[2,16,16], index: 3, kind: output, shape index: {}]
  %s4 = sld [smem:[#allocation0]]
  $region45: #{se_conv1d.5} parent=0
    _
  %s6 = ssub.s32 1, %s4
  %s7 = scalar_select 0, %s6, %s4
  $region1: #{se_conv1d.5} parent=0
    #allocation2 [shape = 'u8[16384]{0}', space=vmem, size = 0x4000, scoped, tag = 'output window, operand 0']
    #allocation3 [shape = 's32[2]{0}', space=sflag, size = 0x8, scoped, tag = 'scoped memory for se_conv1d.5']
    %8 = vsyncpa [#allocation3], 0
    %s9 = scalar_lea.sflag [#allocation3], 1
    %10 = vsyncpa %s9, 0
    loop: start=0, step=1, limit=4
    $region2: #{se_conv1d.5} parent=1 // loop_pre_header
      _
    $region3: #{se_conv1d.5} parent=1 // loop_header
      %s12 = sphi 0, %s16
      %p13 = scmp.ge.s32.totalorder %s12, 4
      %s19 = sphi 0, %s31
      %s20 = sphi 0, %s27
      %s21 = sphi 0, %s19
      %s22 = sphi 0, %s20
      %s23 = sphi 0, %s21
      %s24 = sphi 0, %s22
      %s36 = sphi 0, %s38
      %s39 = sphi 0, %s36
      %s40 = sphi 0, %s39
      %s56 = sphi 0, %s40
      %s62 = sphi 0, %s64
      %s65 = sphi 0, %s62
      %s66 = sphi 0, %s65
      %s82 = sphi 0, %s66
      %s90 = sphi 0, %s92
      %s93 = sphi 0, %s90
      %s94 = sphi 0, %s93
      %s110 = sphi 0, %s94
      %s118 = sphi 0, %s120
      %s121 = sphi 0, %s118
      %s122 = sphi 0, %s121
      %s138 = sphi 0, %s122
    $region4: #{se_conv1d.5} parent=1 // loop_header_branch
      %15 = sbr.rel (%p13) target = $region8
    $region5: #{se_conv1d.5} parent=1 // loop_body
      %s17 = ssub.s32 %s12, 1
      %s18 = ssub.s32 %s12, 2
      %s25 = sadd.s32 1, %s20
      %p26 = scmp.ge.s32.totalorder %s25, 1
      %s27 = scalar_select %p26, 0, %s25
      %s28 = sadd.s32 1, %s19
      %s29 = scalar_select %p26, %s28, %s19
      %p30 = scmp.ge.s32.totalorder %s29, 2
      %s31 = scalar_select %p30, 0, %s29
      %s32 = ssub.s32 %s19, %s31
      %s33 = ssub.s32 %s20, %s27
      %s34 = sor.u32 %s32, %s33
      %p35 = scmp.eq.s32.totalorder %s34, 0
      %s37 = sadd.s32 %s36, 1
      %s38 = scalar_select %p35, %s36, %s37
      %p41 = pneg %p35
      %p42 = scmp.eq.s32.totalorder %s12, 1
      %p43 = por %p41, %p42
      %p44 = scmp.ne.s32.totalorder %s36, %s39
      %p45 = scmp.eq.s32.totalorder %s12, 0
      %p46 = por %p44, %p45
      %p47 = scmp.ne.s32.totalorder %s36, %s39
      %p48 = scmp.eq.s32.totalorder %s17, 1
      %p49 = por %p47, %p48
      %p50 = scmp.ne.s32.totalorder %s39, %s40
      %p51 = scmp.eq.s32.totalorder %s17, 0
      %p52 = por %p50, %p51
      %p53 = scmp.ne.s32.totalorder %s39, %s40
      %p54 = scmp.eq.s32.totalorder %s18, 1
      %p55 = por %p53, %p54
      %p57 = scmp.ne.s32.totalorder %s40, %s56
      %p58 = scmp.eq.s32.totalorder %s18, 0
      %p59 = por %p57, %p58
      %s60 = ssub.s32 %s19, %s31
      %p61 = scmp.eq.s32.totalorder %s60, 0
      %s63 = sadd.s32 %s62, 1
      %s64 = scalar_select %p61, %s62, %s63
      %p67 = pneg %p61
      %p68 = scmp.eq.s32.totalorder %s12, 1
      %p69 = por %p67, %p68
      %p70 = scmp.ne.s32.totalorder %s62, %s65
      %p71 = scmp.eq.s32.totalorder %s12, 0
      %p72 = por %p70, %p71
      %p73 = scmp.ne.s32.totalorder %s62, %s65
      %p74 = scmp.eq.s32.totalorder %s17, 1
      %p75 = por %p73, %p74
      %p76 = scmp.ne.s32.totalorder %s65, %s66
      %p77 = scmp.eq.s32.totalorder %s17, 0
      %p78 = por %p76, %p77
      %p79 = scmp.ne.s32.totalorder %s65, %s66
      %p80 = scmp.eq.s32.totalorder %s18, 1
      %p81 = por %p79, %p80
      %p83 = scmp.ne.s32.totalorder %s66, %s82
      %p84 = scmp.eq.s32.totalorder %s18, 0
      %p85 = por %p83, %p84
      %s86 = ssub.s32 %s19, %s31
      %s87 = ssub.s32 %s20, %s27
      %s88 = sor.u32 %s86, %s87
      %p89 = scmp.eq.s32.totalorder %s88, 0
      %s91 = sadd.s32 %s90, 1
      %s92 = scalar_select %p89, %s90, %s91
      %p95 = pneg %p89
      %p96 = scmp.eq.s32.totalorder %s12, 1
      %p97 = por %p95, %p96
      %p98 = scmp.ne.s32.totalorder %s90, %s93
      %p99 = scmp.eq.s32.totalorder %s12, 0
      %p100 = por %p98, %p99
      %p101 = scmp.ne.s32.totalorder %s90, %s93
      %p102 = scmp.eq.s32.totalorder %s17, 1
      %p103 = por %p101, %p102
      %p104 = scmp.ne.s32.totalorder %s93, %s94
      %p105 = scmp.eq.s32.totalorder %s17, 0
      %p106 = por %p104, %p105
      %p107 = scmp.ne.s32.totalorder %s93, %s94
      %p108 = scmp.eq.s32.totalorder %s18, 1
      %p109 = por %p107, %p108
      %p111 = scmp.ne.s32.totalorder %s94, %s110
      %p112 = scmp.eq.s32.totalorder %s18, 0
      %p113 = por %p111, %p112
      %s114 = ssub.s32 %s19, %s31
      %s115 = ssub.s32 %s20, %s27
      %s116 = sor.u32 %s114, %s115
      %p117 = scmp.eq.s32.totalorder %s116, 0
      %s119 = sadd.s32 %s118, 1
      %s120 = scalar_select %p117, %s118, %s119
      %p123 = pneg %p117
      %p124 = scmp.eq.s32.totalorder %s12, 1
      %p125 = por %p123, %p124
      %p126 = scmp.ne.s32.totalorder %s118, %s121
      %p127 = scmp.eq.s32.totalorder %s12, 0
      %p128 = por %p126, %p127
      %p129 = scmp.ne.s32.totalorder %s118, %s121
      %p130 = scmp.eq.s32.totalorder %s17, 1
      %p131 = por %p129, %p130
      %p132 = scmp.ne.s32.totalorder %s121, %s122
      %p133 = scmp.eq.s32.totalorder %s17, 0
      %p134 = por %p132, %p133
      %p135 = scmp.ne.s32.totalorder %s121, %s122
      %p136 = scmp.eq.s32.totalorder %s18, 1
      %p137 = por %p135, %p136
      %p139 = scmp.ne.s32.totalorder %s122, %s138
      %p140 = scmp.eq.s32.totalorder %s18, 0
      %p141 = por %p139, %p140
      %p142 = scmp.le.s32.totalorder 1, %s12
      %p143 = scmp.lt.s32.totalorder %s12, 3
      %p144 = pnand %p142, %p143
      %p145 = pneg %p144
      // Predicated region
      $region9: #{se_conv1d.5} parent=5 // pred_check
        _
      $region10: #{se_conv1d.5} parent=5 // pred_check_branch
        %147 = sbr.rel (%p144) target = $region12
      $region11: #{se_conv1d.5} parent=5 // pred_region
        %s148 = ssub.s32 %s12, 1
      $region12: #{se_conv1d.5} parent=5 // pred_fallthru
        _
      %p149 = scmp.lt.s32.totalorder %s12, 2
      // Predicated region
      $region13: #{se_conv1d.5} parent=5 // pred_check
        %p150 = pneg %p149
      $region14: #{se_conv1d.5} parent=5 // pred_check_branch
        %152 = sbr.rel (%p150) target = $region16
      $region15: #{se_conv1d.5} parent=5 // pred_region
        // Predicated region
        $region17: #{se_conv1d.5} parent=15 // pred_check
          %p153 = pneg %p46
        $region18: #{se_conv1d.5} parent=15 // pred_check_branch
          %155 = sbr.rel (%p153) target = $region20
        $region19: #{se_conv1d.5} parent=15 // pred_region
          %p156 = scmp.lt.s32.totalorder %s19, 1
          %s157 = scalar_select %p156, %s19, 1
          %p158 = scmp.lt.s32.totalorder %s20, 0
          %s159 = scalar_select %p158, %s20, 0
          %s160 = smul.addr %s157, 2
          %s161 = sadd.s32 %s159, %s160
          %s162 = smul.addr %s161, 4
          %s163 = scalar_lea.vmem %s0, %s162
        $region20: #{se_conv1d.5} parent=15 // pred_fallthru
          _
        // Predicated region
        $region21: #{se_conv1d.5} parent=15 // pred_check
          %p164 = pneg %p72
        $region22: #{se_conv1d.5} parent=15 // pred_check_branch
          %166 = sbr.rel (%p164) target = $region24
        $region23: #{se_conv1d.5} parent=15 // pred_region
          %p167 = scmp.lt.s32.totalorder %s19, 1
          %s168 = scalar_select %p167, %s19, 1
          %s169 = smul.addr %s168, 2
          %s170 = smul.addr %s169, 8
          %s171 = scalar_lea.vmem %s1, %s170
        $region24: #{se_conv1d.5} parent=15 // pred_fallthru
          _
        // Predicated region
        $region25: #{se_conv1d.5} parent=15 // pred_check
          %p172 = pneg %p100
        $region26: #{se_conv1d.5} parent=15 // pred_check_branch
          %174 = sbr.rel (%p172) target = $region28
        $region27: #{se_conv1d.5} parent=15 // pred_region
          %p175 = scmp.lt.s32.totalorder %s19, 1
          %s176 = scalar_select %p175, %s19, 1
          %p177 = scmp.lt.s32.totalorder %s20, 0
          %s178 = scalar_select %p177, %s20, 0
          %s179 = smul.addr %s176, 2
          %s180 = sadd.s32 %s178, %s179
          %s181 = smul.addr %s180, 8
          %s182 = scalar_lea.vmem %s2, %s181
        $region28: #{se_conv1d.5} parent=15 // pred_fallthru
          _
      $region16: #{se_conv1d.5} parent=5 // pred_fallthru
        _
      %p183 = scmp.le.s32.totalorder 1, %s12
      %p184 = scmp.lt.s32.totalorder %s12, 3
      %p185 = pnand %p183, %p184
      %p186 = pneg %p185
      // Predicated region
      $region29: #{se_conv1d.5} parent=5 // pred_check
        _
      $region30: #{se_conv1d.5} parent=5 // pred_check_branch
        %188 = sbr.rel (%p185) target = $region32
      $region31: #{se_conv1d.5} parent=5 // pred_region
        %s189 = ssub.s32 %s12, 1
        %p190 = scmp.lt.s32.totalorder %s21, 1
        %s191 = scalar_select %p190, %s21, 1
        %p192 = scmp.lt.s32.totalorder %s22, 0
        %s193 = scalar_select %p192, %s22, 0
        %s194 = smul.addr %s191, 2
        %s195 = sadd.s32 %s193, %s194
        %s196 = smul.addr %s195, 4
        %s197 = scalar_lea.vmem %s0, %s196
        %p198 = pneg %p52
        %p199 = pneg %p49
        %p200 = scmp.lt.s32.totalorder %s21, 1
        %s201 = scalar_select %p200, %s21, 1
        %s202 = smul.addr %s201, 2
        %s203 = smul.addr %s202, 8
        %s204 = scalar_lea.vmem %s1, %s203
        %p205 = pneg %p78
        %p206 = pneg %p75
        %p207 = scmp.lt.s32.totalorder %s21, 1
        %s208 = scalar_select %p207, %s21, 1
        %p209 = scmp.lt.s32.totalorder %s22, 0
        %s210 = scalar_select %p209, %s22, 0
        %s211 = smul.addr %s208, 2
        %s212 = sadd.s32 %s210, %s211
        %s213 = smul.addr %s212, 8
        %s214 = scalar_lea.vmem %s2, %s213
        %p215 = pneg %p106
        %p216 = pneg %p103
        %p217 = pneg %p134
        %p218 = pneg %p131
        %s219 = sand.u32 %s121, 1
        %s220 = scalar_lea.sflag [#allocation3], %s219
        %s221 = sand.u32 %s121, 1
        %s222 = smul.addr %s221, 16
        %s223 = scalar_lea.vmem [#allocation2], %s222
        %p224 = scmp.lt.s32.totalorder %s21, 1
        %s225 = scalar_select %p224, %s21, 1
        %p226 = scmp.lt.s32.totalorder %s22, 0
        %s227 = scalar_select %p226, %s22, 0
        %s228 = smul.addr %s225, 2
        %s229 = sadd.s32 %s227, %s228
        %s230 = smul.addr %s229, 4
        %s231 = scalar_lea.vmem %s0, %s230
        %p232 = scmp.lt.s32.totalorder %s21, 1
        %s233 = scalar_select %p232, %s21, 1
        %s234 = smul.addr %s233, 2
        %s235 = smul.addr %s234, 8
        %s236 = scalar_lea.vmem %s1, %s235
        %p237 = scmp.lt.s32.totalorder %s21, 1
        %s238 = scalar_select %p237, %s21, 1
        %p239 = scmp.lt.s32.totalorder %s22, 0
        %s240 = scalar_select %p239, %s22, 0
        %s241 = smul.addr %s238, 2
        %s242 = sadd.s32 %s240, %s241
        %s243 = smul.addr %s242, 8
        %s244 = scalar_lea.vmem %s2, %s243
        %v245 = vld [vmem:[%s231] sm:$0xf]
        %v246 = vld [vmem:[%s231 + $0x4] sm:$0xf]
        %v247 = vunpack.c.l.bf16 %v245
        %v248 = vunpack.c.l.bf16 %v246
        %v249 = vld [vmem:[%s236] sm:$0xff]
        %v250 = vld [vmem:[%s236 + $0x8] sm:$0xff]
        %252 = vset.pattern.permute.xlu0 0
        %253 = vperm.xlu0 %252, %v249
        %v254 = vpop.permute.xlu0 %253
        %257 = vset.pattern.permute.xlu0 0
        %258 = vperm.xlu0 %257, %v250
        %v259 = vpop.permute.xlu0 %258
        %v261 = vmul.f32 %v247, %v254
        %v262 = vmul.f32 %v248, %v259
        %263 = vset.pattern.permute.xlu0 1
        %264 = vperm.xlu0 %263, %v249
        %v265 = vpop.permute.xlu0 %264
        %267 = vset.pattern.permute.xlu0 1
        %268 = vperm.xlu0 %267, %v250
        %v269 = vpop.permute.xlu0 %268
        %v271 = vadd.f32 %v261, %v265
        %v272 = vadd.f32 %v262, %v269
        %v273 = vmax.f32 %v271, 0.0
        %v274 = vmax.f32 %v272, 0.0
        %v275 = vld [vmem:[%s244] sm:$0xff]
        %v276 = vld [vmem:[%s244 + $0x8] sm:$0xff]
        %v277 = vadd.f32 %v273, %v275
        %v278 = vadd.f32 %v274, %v276
        %279 = vst [vmem:[%s223] sm:$0xff] %v277
        %280 = vst [vmem:[%s223 + $0x8] sm:$0xff] %v278
        %s281 = sand.u32 %s121, 1
        %s282 = scalar_lea.sflag [#allocation3], %s281
        %s283 = sand.u32 %s121, 1
        %s284 = smul.addr %s283, 16
        %s285 = scalar_lea.vmem [#allocation2], %s284
        // Predicated region
        $region33: #{se_conv1d.5} parent=31 // pred_check
          %p286 = pneg %p131
        $region34: #{se_conv1d.5} parent=31 // pred_check_branch
          %288 = sbr.rel (%p286) target = $region36
        $region35: #{se_conv1d.5} parent=31 // pred_region
          %290 = vsyncadd %s282, 0
          %s291 = smul.addr %s21, 2
          %s292 = sadd.s32 %s22, %s291
          %s293 = smul.addr %s292, 8
          %s294 = scalar_lea.hbm %s3, %s293
          %s295 = sshll.u32 %s285, 4
          %s296 = int_to_ptr.vmem [resolvable:$true] %s295
          %s297 = sshll.u32 %s294, 4
          %s298 = int_to_ptr.hbm [resolvable:$true] %s297
          %303 = dma.vmem_to_hbm [thread:$0]  %s296, 256, %s298, %s282, 128, 128, 8
        $region36: #{se_conv1d.5} parent=31 // pred_fallthru
          _
      $region32: #{se_conv1d.5} parent=5 // pred_fallthru
        _
      %p304 = scmp.le.s32.totalorder 2, %s12
      // Predicated region
      $region37: #{se_conv1d.5} parent=5 // pred_check
        %p305 = pneg %p304
      $region38: #{se_conv1d.5} parent=5 // pred_check_branch
        %307 = sbr.rel (%p305) target = $region40
      $region39: #{se_conv1d.5} parent=5 // pred_region
        %s308 = ssub.s32 %s12, 2
        // Predicated region
        $region41: #{se_conv1d.5} parent=39 // pred_check
          %p309 = pneg %p137
        $region42: #{se_conv1d.5} parent=39 // pred_check_branch
          %311 = sbr.rel (%p309) target = $region44
        $region43: #{se_conv1d.5} parent=39 // pred_region
          %s312 = sand.u32 %s122, 1
          %s313 = scalar_lea.sflag [#allocation3], %s312
          %s314 = sand.u32 %s122, 1
          %s315 = smul.addr %s314, 16
          %s316 = scalar_lea.vmem [#allocation2], %s315
          %318 = dma.done %s313, 256
        $region44: #{se_conv1d.5} parent=39 // pred_fallthru
          _
      $region40: #{se_conv1d.5} parent=5 // pred_fallthru
        _
    $region6: #{se_conv1d.5} parent=1 // loop_footer
      %s16 = sadd.s32 1, %s12
    $region7: #{se_conv1d.5} parent=1 // loop_footer_branch
      %11 = sbr.rel target = $region3
    $region8: #{se_conv1d.5} parent=1 // loop_exit
      _
    %319 = vsyncpa [#allocation3], 1
    %s320 = scalar_lea.sflag [#allocation3], 1
    %321 = vsyncpa %s320, 1

// kernel: se_conv1d.3
$region0: #{se_conv1d.3}
  #allocation0 [shape = 'u32[]', space=smem, size = 0x4, offset = 0x4, fixed_abs, tag = 'smem constant byte address 0x4 - core index']
  #allocation1 [shape = 'u32[72,128]{1,0:T(1,128)}', space=vmem, size = 0x9000, scoped, tag = 'internal scratch']
  %s0 = inlined_call_operand.vmem [shape: bf16[2,16,256], index: 0, kind: input, shape index: {}, may-alias: {0,1}]
  %s1 = inlined_call_operand.vmem [shape: bf16[2,16,256], index: 1, kind: input, shape index: {}, may-alias: {0,1}]
  %s2 = inlined_call_operand.vmem [shape: bf16[3,16,16], index: 2, kind: input, shape index: {}]
  %s3 = inlined_call_operand.vmem [shape: bf16[2,16,128], index: 3, kind: output, shape index: {0}]
  %s4 = inlined_call_operand.vmem [shape: f32[2,16,2], index: 4, kind: output, shape index: {1}]
  %5 = xla_tuple %s3, %s4
  %s6 = sld [smem:[#allocation0]]
  $region143: #{se_conv1d.3} parent=0
    _
  %s8 = ssub.s32 1, %s6
  %s9 = scalar_select 0, %s8, %s6
  $region1: #{se_conv1d.3} parent=0
    #allocation2 [shape = 'u8[8192]{0}', space=vmem, size = 0x2000, scoped, tag = 'input window, operand 0']
    #allocation3 [shape = 'u8[8192]{0}', space=vmem, size = 0x2000, scoped, tag = 'input window, operand 1']
    loop: start=0, step=1, limit=4
    $region2: #{se_conv1d.3} parent=1 // loop_pre_header
      _
    $region3: #{se_conv1d.3} parent=1 // loop_header
      %s11 = sphi 0, %s15
      %p12 = scmp.ge.s32.totalorder %s11, 4
      %s18 = sphi 0, %s30
      %s19 = sphi 0, %s26
      %s20 = sphi 0, %s18
      %s21 = sphi 0, %s19
      %s22 = sphi 0, %s20
      %s23 = sphi 0, %s21
      %s35 = sphi 0, %s37
      %s38 = sphi 0, %s35
      %s39 = sphi 0, %s38
      %s55 = sphi 0, %s39
      %s65 = sphi 0, %s67
      %s68 = sphi 0, %s65
      %s69 = sphi 0, %s68
      %s85 = sphi 0, %s69
      %s89 = sphi 0, %s89
      %s91 = sphi 0, %s89
      %s92 = sphi 0, %s91
      %s106 = sphi 0, %s92
      %s114 = sphi 0, %s116
      %s117 = sphi 0, %s114
      %s118 = sphi 0, %s117
      %s134 = sphi 0, %s118
      %s140 = sphi 0, %s142
      %s143 = sphi 0, %s140
      %s144 = sphi 0, %s143
      %s160 = sphi 0, %s144
    $region4: #{se_conv1d.3} parent=1 // loop_header_branch
      %14 = sbr.rel (%p12) target = $region8
    $region5: #{se_conv1d.3} parent=1 // loop_body
      %s16 = ssub.s32 %s11, 1
      %s17 = ssub.s32 %s11, 2
      %s24 = sadd.s32 1, %s19
      %p25 = scmp.ge.s32.totalorder %s24, 1
      %s26 = scalar_select %p25, 0, %s24
      %s27 = sadd.s32 1, %s18
      %s28 = scalar_select %p25, %s27, %s18
      %p29 = scmp.ge.s32.totalorder %s28, 2
      %s30 = scalar_select %p29, 0, %s28
      %s31 = ssub.s32 %s18, %s30
      %s32 = ssub.s32 %s19, %s26
      %s33 = sor.u32 %s31, %s32
      %p34 = scmp.eq.s32.totalorder %s33, 0
      %s36 = sadd.s32 %s35, 1
      %s37 = scalar_select %p34, %s35, %s36
      %p40 = pneg %p34
      %p41 = scmp.eq.s32.totalorder %s11, 1
      %p42 = por %p40, %p41
      %p43 = scmp.ne.s32.totalorder %s35, %s38
      %p44 = scmp.eq.s32.totalorder %s11, 0
      %p45 = por %p43, %p44
      %p46 = scmp.ne.s32.totalorder %s35, %s38
      %p47 = scmp.eq.s32.totalorder %s16, 1
      %p48 = por %p46, %p47
      %p49 = scmp.ne.s32.totalorder %s38, %s39
      %p50 = scmp.eq.s32.totalorder %s16, 0
      %p51 = por %p49, %p50
      %p52 = scmp.ne.s32.totalorder %s38, %s39
      %p53 = scmp.eq.s32.totalorder %s17, 1
      %p54 = por %p52, %p53
      %p56 = scmp.ne.s32.totalorder %s39, %s55
      %p57 = scmp.eq.s32.totalorder %s17, 0
      %p58 = por %p56, %p57
      %s59 = sadd.s32 %s19, 1
      %s60 = sadd.s32 %s26, 1
      %s61 = ssub.s32 %s18, %s30
      %s62 = ssub.s32 %s59, %s60
      %s63 = sor.u32 %s61, %s62
      %p64 = scmp.eq.s32.totalorder %s63, 0
      %s66 = sadd.s32 %s65, 1
      %s67 = scalar_select %p64, %s65, %s66
      %p70 = pneg %p64
      %p71 = scmp.eq.s32.totalorder %s11, 1
      %p72 = por %p70, %p71
      %p73 = scmp.ne.s32.totalorder %s65, %s68
      %p74 = scmp.eq.s32.totalorder %s11, 0
      %p75 = por %p73, %p74
      %p76 = scmp.ne.s32.totalorder %s65, %s68
      %p77 = scmp.eq.s32.totalorder %s16, 1
      %p78 = por %p76, %p77
      %p79 = scmp.ne.s32.totalorder %s68, %s69
      %p80 = scmp.eq.s32.totalorder %s16, 0
      %p81 = por %p79, %p80
      %p82 = scmp.ne.s32.totalorder %s68, %s69
      %p83 = scmp.eq.s32.totalorder %s17, 1
      %p84 = por %p82, %p83
      %p86 = scmp.ne.s32.totalorder %s69, %s85
      %p87 = scmp.eq.s32.totalorder %s17, 0
      %p88 = por %p86, %p87
      %s90 = sadd.s32 %s89, 1
      %p93 = scmp.eq.s32.totalorder %s11, 1
      %p94 = scmp.ne.s32.totalorder %s89, %s91
      %p95 = scmp.eq.s32.totalorder %s11, 0
      %p96 = por %p94, %p95
      %p97 = scmp.ne.s32.totalorder %s89, %s91
      %p98 = scmp.eq.s32.totalorder %s16, 1
      %p99 = por %p97, %p98
      %p100 = scmp.ne.s32.totalorder %s91, %s92
      %p101 = scmp.eq.s32.totalorder %s16, 0
      %p102 = por %p100, %p101
      %p103 = scmp.ne.s32.totalorder %s91, %s92
      %p104 = scmp.eq.s32.totalorder %s17, 1
      %p105 = por %p103, %p104
      %p107 = scmp.ne.s32.totalorder %s92, %s106
      %p108 = scmp.eq.s32.totalorder %s17, 0
      %p109 = por %p107, %p108
      %s110 = ssub.s32 %s18, %s30
      %s111 = ssub.s32 %s19, %s26
      %s112 = sor.u32 %s110, %s111
      %p113 = scmp.eq.s32.totalorder %s112, 0
      %s115 = sadd.s32 %s114, 1
      %s116 = scalar_select %p113, %s114, %s115
      %p119 = pneg %p113
      %p120 = scmp.eq.s32.totalorder %s11, 1
      %p121 = por %p119, %p120
      %p122 = scmp.ne.s32.totalorder %s114, %s117
      %p123 = scmp.eq.s32.totalorder %s11, 0
      %p124 = por %p122, %p123
      %p125 = scmp.ne.s32.totalorder %s114, %s117
      %p126 = scmp.eq.s32.totalorder %s16, 1
      %p127 = por %p125, %p126
      %p128 = scmp.ne.s32.totalorder %s117, %s118
      %p129 = scmp.eq.s32.totalorder %s16, 0
      %p130 = por %p128, %p129
      %p131 = scmp.ne.s32.totalorder %s117, %s118
      %p132 = scmp.eq.s32.totalorder %s17, 1
      %p133 = por %p131, %p132
      %p135 = scmp.ne.s32.totalorder %s118, %s134
      %p136 = scmp.eq.s32.totalorder %s17, 0
      %p137 = por %p135, %p136
      %s138 = ssub.s32 %s18, %s30
      %p139 = scmp.eq.s32.totalorder %s138, 0
      %s141 = sadd.s32 %s140, 1
      %s142 = scalar_select %p139, %s140, %s141
      %p145 = pneg %p139
      %p146 = scmp.eq.s32.totalorder %s11, 1
      %p147 = por %p145, %p146
      %p148 = scmp.ne.s32.totalorder %s140, %s143
      %p149 = scmp.eq.s32.totalorder %s11, 0
      %p150 = por %p148, %p149
      %p151 = scmp.ne.s32.totalorder %s140, %s143
      %p152 = scmp.eq.s32.totalorder %s16, 1
      %p153 = por %p151, %p152
      %p154 = scmp.ne.s32.totalorder %s143, %s144
      %p155 = scmp.eq.s32.totalorder %s16, 0
      %p156 = por %p154, %p155
      %p157 = scmp.ne.s32.totalorder %s143, %s144
      %p158 = scmp.eq.s32.totalorder %s17, 1
      %p159 = por %p157, %p158
      %p161 = scmp.ne.s32.totalorder %s144, %s160
      %p162 = scmp.eq.s32.totalorder %s17, 0
      %p163 = por %p161, %p162
      %p164 = scmp.le.s32.totalorder 1, %s11
      %p165 = scmp.lt.s32.totalorder %s11, 3
      %p166 = pnand %p164, %p165
      %p167 = pneg %p166
      // Predicated region
      $region9: #{se_conv1d.3} parent=5 // pred_check
        _
      $region10: #{se_conv1d.3} parent=5 // pred_check_branch
        %169 = sbr.rel (%p166) target = $region12
      $region11: #{se_conv1d.3} parent=5 // pred_region
        %s170 = ssub.s32 %s11, 1
        // Predicated region
        $region13: #{se_conv1d.3} parent=11 // pred_check
          %p171 = pneg %p102
        $region14: #{se_conv1d.3} parent=11 // pred_check_branch
          %173 = sbr.rel (%p171) target = $region16
        $region15: #{se_conv1d.3} parent=11 // pred_region
          _
        $region16: #{se_conv1d.3} parent=11 // pred_fallthru
          _
      $region12: #{se_conv1d.3} parent=5 // pred_fallthru
        _
      %p174 = scmp.lt.s32.totalorder %s11, 2
      // Predicated region
      $region17: #{se_conv1d.3} parent=5 // pred_check
        %p175 = pneg %p174
      $region18: #{se_conv1d.3} parent=5 // pred_check_branch
        %177 = sbr.rel (%p175) target = $region20
      $region19: #{se_conv1d.3} parent=5 // pred_region
        // Predicated region
        $region21: #{se_conv1d.3} parent=19 // pred_check
          %p178 = pneg %p45
        $region22: #{se_conv1d.3} parent=19 // pred_check_branch
          %180 = sbr.rel (%p178) target = $region24
        $region23: #{se_conv1d.3} parent=19 // pred_region
          %s181 = sand.u32 %s35, 1
          %s182 = sand.u32 %s35, 1
          %s183 = smul.addr %s182, 8
          %s184 = scalar_lea.vmem [#allocation2], %s183
          %s185 = smul.addr %s18, 4
          %s186 = sadd.s32 %s19, %s185
          %s187 = smul.addr %s186, 4
          %s188 = scalar_lea.vmem %s0, %s187
          // Predicated region
          $region25: #{se_conv1d.3} parent=23 // pred_check
            _
          $region26: #{se_conv1d.3} parent=23 // pred_check_branch
            %190 = sbr.rel (0) target = $region28
          $region27: #{se_conv1d.3} parent=23 // pred_region
            // Predicated region
            $region29: #{se_conv1d.3} parent=27 // pred_check
              _
            $region30: #{se_conv1d.3} parent=27 // pred_check_branch
              %192 = sbr.rel target = $region32
            $region31: #{se_conv1d.3} parent=27 // pred_region
              // Predicated region
              $region44: #{se_conv1d.3} parent=31 // pred_check
                _
              $region45: #{se_conv1d.3} parent=31 // pred_check_branch
                %210 = sbr.rel (0) target = $region47
              $region46: #{se_conv1d.3} parent=31 // pred_region
                loop: start=0, step=1, limit=1
                $region48: #{se_conv1d.3} parent=46 // loop_pre_header
                  _
                $region49: #{se_conv1d.3} parent=46 // loop_header
                  %s212 = sphi 0, %s216
                  %p213 = scmp.ge.s32.totalorder %s212, 1
                  %s217 = sphi %s188, %s188
                  %s218 = sphi %s184, %s184
                $region50: #{se_conv1d.3} parent=46 // loop_header_branch
                  %215 = sbr.rel (%p213) target = $region54
                $region51: #{se_conv1d.3} parent=46 // loop_body
                  _
                $region52: #{se_conv1d.3} parent=46 // loop_footer
                  %s216 = sadd.s32 1, %s212
                $region53: #{se_conv1d.3} parent=46 // loop_footer_branch
                  %211 = sbr.rel target = $region49
                $region54: #{se_conv1d.3} parent=46 // loop_exit
                  _
                %s220 = ssub.s32 16, 1
                loop: start=0, step=1, limit=1
                $region55: #{se_conv1d.3} parent=46 // loop_pre_header
                  _
                $region56: #{se_conv1d.3} parent=46 // loop_header
                  %s222 = sphi 0, %s226
                  %p223 = scmp.ge.s32.totalorder %s222, 1
                  %s227 = sphi %s188, %s188
                  %s228 = sphi %s184, %s184
                $region57: #{se_conv1d.3} parent=46 // loop_header_branch
                  %225 = sbr.rel (%p223) target = $region61
                $region58: #{se_conv1d.3} parent=46 // loop_body
                  %v229 = vld [vmem:[%s227] sm:%s220]
                  %230 = vst [vmem:[%s228] sm:%s220] %v229
                  %v231 = vld [vmem:[%s227 + $0x8] sm:%s220]
                  %232 = vst [vmem:[%s228 + $0x4] sm:%s220] %v231
                $region59: #{se_conv1d.3} parent=46 // loop_footer
                  %s226 = sadd.s32 1, %s222
                $region60: #{se_conv1d.3} parent=46 // loop_footer_branch
                  %221 = sbr.rel target = $region56
                $region61: #{se_conv1d.3} parent=46 // loop_exit
                  _
              $region47: #{se_conv1d.3} parent=31 // pred_fallthru
                _
            $region32: #{se_conv1d.3} parent=27 // pred_fallthru
              _
            // Predicated region
            $region33: #{se_conv1d.3} parent=27 // pred_check
              _
            $region34: #{se_conv1d.3} parent=27 // pred_check_branch
              %194 = sbr.rel (0) target = $region36
            $region35: #{se_conv1d.3} parent=27 // pred_region
              %s196 = ssub.s32 16, 1
              loop: start=0, step=1, limit=1
              $region37: #{se_conv1d.3} parent=35 // loop_pre_header
                _
              $region38: #{se_conv1d.3} parent=35 // loop_header
                %s198 = sphi 0, %s202
                %p199 = scmp.ge.s32.totalorder %s198, 1
                %s203 = sphi %s188, %s188
                %s204 = sphi %s184, %s184
              $region39: #{se_conv1d.3} parent=35 // loop_header_branch
                %201 = sbr.rel (%p199) target = $region43
              $region40: #{se_conv1d.3} parent=35 // loop_body
                %v205 = vld [vmem:[%s203] sm:%s196]
                %206 = vst [vmem:[%s204] sm:%s196] %v205
                %v207 = vld [vmem:[%s203 + $0x8] sm:%s196]
                %208 = vst [vmem:[%s204 + $0x4] sm:%s196] %v207
              $region41: #{se_conv1d.3} parent=35 // loop_footer
                %s202 = sadd.s32 1, %s198
              $region42: #{se_conv1d.3} parent=35 // loop_footer_branch
                %197 = sbr.rel target = $region38
              $region43: #{se_conv1d.3} parent=35 // loop_exit
                _
            $region36: #{se_conv1d.3} parent=27 // pred_fallthru
              _
          $region28: #{se_conv1d.3} parent=23 // pred_fallthru
            _
          %233 = vnop
        $region24: #{se_conv1d.3} parent=19 // pred_fallthru
          _
        // Predicated region
        $region62: #{se_conv1d.3} parent=19 // pred_check
          %p234 = pneg %p75
        $region63: #{se_conv1d.3} parent=19 // pred_check_branch
          %236 = sbr.rel (%p234) target = $region65
        $region64: #{se_conv1d.3} parent=19 // pred_region
          %s237 = sand.u32 %s65, 1
          %s238 = sand.u32 %s65, 1
          %s239 = smul.addr %s238, 8
          %s240 = scalar_lea.vmem [#allocation3], %s239
          %s241 = sadd.s32 %s19, 1
          %s242 = smul.addr %s18, 4
          %s243 = sadd.s32 %s241, %s242
          %s244 = smul.addr %s243, 4
          %s245 = scalar_lea.vmem %s1, %s244
          // Predicated region
          $region66: #{se_conv1d.3} parent=64 // pred_check
            _
          $region67: #{se_conv1d.3} parent=64 // pred_check_branch
            %247 = sbr.rel (0) target = $region69
          $region68: #{se_conv1d.3} parent=64 // pred_region
            // Predicated region
            $region70: #{se_conv1d.3} parent=68 // pred_check
              _
            $region71: #{se_conv1d.3} parent=68 // pred_check_branch
              %249 = sbr.rel target = $region73
            $region72: #{se_conv1d.3} parent=68 // pred_region
              // Predicated region
              $region85: #{se_conv1d.3} parent=72 // pred_check
                _
              $region86: #{se_conv1d.3} parent=72 // pred_check_branch
                %267 = sbr.rel (0) target = $region88
              $region87: #{se_conv1d.3} parent=72 // pred_region
                loop: start=0, step=1, limit=1
                $region89: #{se_conv1d.3} parent=87 // loop_pre_header
                  _
                $region90: #{se_conv1d.3} parent=87 // loop_header
                  %s269 = sphi 0, %s273
                  %p270 = scmp.ge.s32.totalorder %s269, 1
                  %s274 = sphi %s245, %s245
                  %s275 = sphi %s240, %s240
                $region91: #{se_conv1d.3} parent=87 // loop_header_branch
                  %272 = sbr.rel (%p270) target = $region95
                $region92: #{se_conv1d.3} parent=87 // loop_body
                  _
                $region93: #{se_conv1d.3} parent=87 // loop_footer
                  %s273 = sadd.s32 1, %s269
                $region94: #{se_conv1d.3} parent=87 // loop_footer_branch
                  %268 = sbr.rel target = $region90
                $region95: #{se_conv1d.3} parent=87 // loop_exit
                  _
                %s277 = ssub.s32 16, 1
                loop: start=0, step=1, limit=1
                $region96: #{se_conv1d.3} parent=87 // loop_pre_header
                  _
                $region97: #{se_conv1d.3} parent=87 // loop_header
                  %s279 = sphi 0, %s283
                  %p280 = scmp.ge.s32.totalorder %s279, 1
                  %s284 = sphi %s245, %s245
                  %s285 = sphi %s240, %s240
                $region98: #{se_conv1d.3} parent=87 // loop_header_branch
                  %282 = sbr.rel (%p280) target = $region102
                $region99: #{se_conv1d.3} parent=87 // loop_body
                  %v286 = vld [vmem:[%s284] sm:%s277]
                  %287 = vst [vmem:[%s285] sm:%s277] %v286
                  %v288 = vld [vmem:[%s284 + $0x8] sm:%s277]
                  %289 = vst [vmem:[%s285 + $0x4] sm:%s277] %v288
                $region100: #{se_conv1d.3} parent=87 // loop_footer
                  %s283 = sadd.s32 1, %s279
                $region101: #{se_conv1d.3} parent=87 // loop_footer_branch
                  %278 = sbr.rel target = $region97
                $region102: #{se_conv1d.3} parent=87 // loop_exit
                  _
              $region88: #{se_conv1d.3} parent=72 // pred_fallthru
                _
            $region73: #{se_conv1d.3} parent=68 // pred_fallthru
              _
            // Predicated region
            $region74: #{se_conv1d.3} parent=68 // pred_check
              _
            $region75: #{se_conv1d.3} parent=68 // pred_check_branch
              %251 = sbr.rel (0) target = $region77
            $region76: #{se_conv1d.3} parent=68 // pred_region
              %s253 = ssub.s32 16, 1
              loop: start=0, step=1, limit=1
              $region78: #{se_conv1d.3} parent=76 // loop_pre_header
                _
              $region79: #{se_conv1d.3} parent=76 // loop_header
                %s255 = sphi 0, %s259
                %p256 = scmp.ge.s32.totalorder %s255, 1
                %s260 = sphi %s245, %s245
                %s261 = sphi %s240, %s240
              $region80: #{se_conv1d.3} parent=76 // loop_header_branch
                %258 = sbr.rel (%p256) target = $region84
              $region81: #{se_conv1d.3} parent=76 // loop_body
                %v262 = vld [vmem:[%s260] sm:%s253]
                %263 = vst [vmem:[%s261] sm:%s253] %v262
                %v264 = vld [vmem:[%s260 + $0x8] sm:%s253]
                %265 = vst [vmem:[%s261 + $0x4] sm:%s253] %v264
              $region82: #{se_conv1d.3} parent=76 // loop_footer
                %s259 = sadd.s32 1, %s255
              $region83: #{se_conv1d.3} parent=76 // loop_footer_branch
                %254 = sbr.rel target = $region79
              $region84: #{se_conv1d.3} parent=76 // loop_exit
                _
            $region77: #{se_conv1d.3} parent=68 // pred_fallthru
              _
          $region69: #{se_conv1d.3} parent=64 // pred_fallthru
            _
          %290 = vnop
        $region65: #{se_conv1d.3} parent=19 // pred_fallthru
          _
      $region20: #{se_conv1d.3} parent=5 // pred_fallthru
        _
      %p291 = scmp.le.s32.totalorder 1, %s11
      %p292 = scmp.lt.s32.totalorder %s11, 3
      %p293 = pnand %p291, %p292
      %p294 = pneg %p293
      // Predicated region
      $region103: #{se_conv1d.3} parent=5 // pred_check
        _
      $region104: #{se_conv1d.3} parent=5 // pred_check_branch
        %296 = sbr.rel (%p293) target = $region106
      $region105: #{se_conv1d.3} parent=5 // pred_region
        %s297 = ssub.s32 %s11, 1
        %s298 = sand.u32 %s38, 1
        %s299 = sand.u32 %s38, 1
        %s300 = smul.addr %s299, 8
        %s301 = scalar_lea.vmem [#allocation2], %s300
        // Predicated region
        $region107: #{se_conv1d.3} parent=105 // pred_check
          %p302 = pneg %p51
        $region108: #{se_conv1d.3} parent=105 // pred_check_branch
          %304 = sbr.rel (%p302) target = $region110
        $region109: #{se_conv1d.3} parent=105 // pred_region
          _
        $region110: #{se_conv1d.3} parent=105 // pred_fallthru
          _
        %s305 = sand.u32 %s68, 1
        %s306 = sand.u32 %s68, 1
        %s307 = smul.addr %s306, 8
        %s308 = scalar_lea.vmem [#allocation3], %s307
        // Predicated region
        $region111: #{se_conv1d.3} parent=105 // pred_check
          %p309 = pneg %p81
        $region112: #{se_conv1d.3} parent=105 // pred_check_branch
          %311 = sbr.rel (%p309) target = $region114
        $region113: #{se_conv1d.3} parent=105 // pred_region
          _
        $region114: #{se_conv1d.3} parent=105 // pred_fallthru
          _
        %s312 = sand.u32 %s38, 1
        %s313 = sand.u32 %s38, 1
        %s314 = smul.addr %s313, 8
        %s315 = scalar_lea.vmem [#allocation2], %s314
        %p316 = pneg %p51
        %p317 = pneg %p48
        %s318 = sand.u32 %s68, 1
        %s319 = sand.u32 %s68, 1
        %s320 = smul.addr %s319, 8
        %s321 = scalar_lea.vmem [#allocation3], %s320
        %p322 = pneg %p81
        %p323 = pneg %p78
        %p324 = pneg %p102
        %p325 = pneg %p99
        %p326 = pneg %p130
        %p327 = pneg %p127
        %p328 = scmp.lt.s32.totalorder %s20, 1
        %s329 = scalar_select %p328, %s20, 1
        %p330 = scmp.lt.s32.totalorder %s21, 0
        %s331 = scalar_select %p330, %s21, 0
        %s332 = smul.addr %s329, 2
        %s333 = sadd.s32 %s331, %s332
        %s334 = smul.addr %s333, 4
        %s335 = scalar_lea.vmem %s3, %s334
        %p336 = pneg %p156
        %p337 = pneg %p153
        %p338 = scmp.lt.s32.totalorder %s20, 1
        %s339 = scalar_select %p338, %s20, 1
        %s340 = smul.addr %s339, 2
        %s341 = smul.addr %s340, 8
        %s342 = scalar_lea.vmem %s4, %s341
        %s343 = sadd.s32 %s21, 1
        %p344 = scmp.lt.s32.totalorder %s20, 1
        %s345 = scalar_select %p344, %s20, 1
        %p346 = scmp.lt.s32.totalorder %s21, 0
        %s347 = scalar_select %p346, %s21, 0
        %s348 = smul.addr %s345, 2
        %s349 = sadd.s32 %s347, %s348
        %s350 = smul.addr %s349, 4
        %s351 = scalar_lea.vmem %s3, %s350
        %p352 = scmp.lt.s32.totalorder %s20, 1
        %s353 = scalar_select %p352, %s20, 1
        %s354 = smul.addr %s353, 2
        %s355 = smul.addr %s354, 8
        %s356 = scalar_lea.vmem %s4, %s355
        %v358 = vld [vmem:[%s301] sm:$0xf]
        %v359 = vld [vmem:[%s301 + $0x4] sm:$0xf]
        %v360 = vld [vmem:[%s308] sm:$0xf]
        %v361 = vld [vmem:[%s308 + $0x4] sm:$0xf]
        %v364 = vunpack.c.l.b16 %v358
        %v365 = vunpack.c.l.b16 %v359
        %v366 = vpack.c.b16 %v365, %v364
        %v370 = vunpack.c.l.b16 %v360
        %v371 = vunpack.c.l.b16 %v361
        %v372 = vpack.c.b16 %v371, %v370
        %v373 = vld [vmem:[%s2] sm:$0xf]
        %v374 = vld [vmem:[%s2 + $0x4] sm:$0xf]
        %s375 = scalar_lea.vmem %s2, 8
        %v376 = vld [vmem:[%s375] sm:$0xf]
        %v377 = vld [vmem:[%s375 + $0x4] sm:$0xf]
        %v380 = vunpack.c.l.b16 %v376
        %v381 = vunpack.c.l.b16 %v377
        %v382 = vpack.c.b16 %v381, %v380
        %383 = vrot.lane.b32.xlu0 %v366, 126
        %v384 = vpop.permute.xlu0 %383
        %385 = vrot.lane.b32.xlu0 %v372, 126
        %v386 = vpop.permute.xlu0 %385
        %vm387 = vcmask 1031168
        %v388 = vsel %vm387, %v384, %v386
        %vm390 = vcmask 130048
        %v392 = vsel %vm390, %v382, 0
        %394 = vmatpush.bf16.msra.mxu0 0
        %395 = vmatpush.bf16.msra.mxu0 0
        %396 = vmatpush.bf16.msra.mxu0 0
        %397 = vmatpush.bf16.msra.mxu0 0
        %398 = vmatpush.bf16.msra.mxu0 0
        %399 = vmatpush.bf16.msra.mxu0 0
        %400 = vmatpush.bf16.msra.mxu0 0
        %401 = vmatpush.bf16.msra.mxu0 %v388
        %402 = vmatmul.bf16.gmra.mxu0 %v392
        %v403 = vpop.f32.mrf.mxu0
        %v404 = vadd.f32 0.0, %v403
        %v405 = vpop.f32.mrf.mxu0
        %v406 = vadd.f32 0.0, %v405
        %407 = vdwg.mxu0
        %v410 = vunpack.c.l.b16 %v373
        %v411 = vunpack.c.l.b16 %v374
        %v412 = vpack.c.b16 %v411, %v410
        %v414 = vsel %vm390, %v412, 0
        %416 = vmatpush.bf16.msra.mxu0 0
        %417 = vmatpush.bf16.msra.mxu0 0
        %418 = vmatpush.bf16.msra.mxu0 0
        %419 = vmatpush.bf16.msra.mxu0 0
        %420 = vmatpush.bf16.msra.mxu0 0
        %421 = vmatpush.bf16.msra.mxu0 0
        %422 = vmatpush.bf16.msra.mxu0 0
        %423 = vmatpush.bf16.msra.mxu0 %v366
        %424 = vmatmul.bf16.gmra.mxu0 %v414
        %v425 = vpop.f32.mrf.mxu0
        %v426 = vadd.f32 %v404, %v425
        %v427 = vpop.f32.mrf.mxu0
        %v428 = vadd.f32 %v406, %v427
        %429 = vdwg.mxu0
        %s430 = scalar_lea.vmem %s2, 16
        %v431 = vld [vmem:[%s430] sm:$0xf]
        %v432 = vld [vmem:[%s430 + $0x4] sm:$0xf]
        %v435 = vunpack.c.l.b16 %v431
        %v436 = vunpack.c.l.b16 %v432
        %v437 = vpack.c.b16 %v436, %v435
        %438 = vrot.lane.b32.xlu0 %v366, 124
        %v439 = vpop.permute.xlu0 %438
        %440 = vrot.lane.b32.xlu0 %v372, 124
        %v441 = vpop.permute.xlu0 %440
        %vm442 = vcmask 1014784
        %v443 = vsel %vm442, %v439, %v441
        %v446 = vsel %vm390, %v437, 0
        %448 = vmatpush.bf16.msra.mxu0 0
        %449 = vmatpush.bf16.msra.mxu0 0
        %450 = vmatpush.bf16.msra.mxu0 0
        %451 = vmatpush.bf16.msra.mxu0 0
        %452 = vmatpush.bf16.msra.mxu0 0
        %453 = vmatpush.bf16.msra.mxu0 0
        %454 = vmatpush.bf16.msra.mxu0 0
        %455 = vmatpush.bf16.msra.mxu0 %v443
        %456 = vmatmul.bf16.gmra.mxu0 %v446
        %v457 = vpop.f32.mrf.mxu0
        %v458 = vadd.f32 0.0, %v457
        %v459 = vpop.f32.mrf.mxu0
        %v460 = vadd.f32 0.0, %v459
        %461 = vdwg.mxu0
        %v462 = vadd.f32 %v426, %v458
        %v463 = vadd.f32 %v428, %v460
        %v464 = vpack.c.bf16 %v462, %v462
        %v465 = vpack.c.bf16 %v463, %v463
        %466 = vst [vmem:[%s351] sm:$0xf] %v464
        %467 = vst [vmem:[%s351 + $0x4] sm:$0xf] %v465
        %v468 = vunpack.c.l.bf16 %v464
        %v469 = vunpack.c.l.bf16 %v465
        %s470 = smul.u32 %s21, 128
        %v471 = vlaneseq
        %v472 = vand.u32 %v471, 127
        %v473 = vstv %s470
        %v474 = vadd.s32 %v473, %v472
        %vm475 = vcmp.lt.s32.totalorder %v474, 16
        %v476 = vsel %vm475, %v468, 0.0
        %v477 = vsel %vm475, %v469, 0.0
        %478 = vadd.xlane.f32.xlu0 %v476
        %v479 = vpop.xlane.xlu0 %478
        %480 = vadd.xlane.f32.xlu0 %v477
        %v481 = vpop.xlane.xlu0 %480
        %v482 = vmul.f32 %v476, %v476
        %v483 = vmul.f32 %v477, %v477
        %484 = vadd.xlane.f32.xlu0 %v482
        %v485 = vpop.xlane.xlu0 %484
        %486 = vadd.xlane.f32.xlu0 %v483
        %v487 = vpop.xlane.xlu0 %486
        %vm488 = vcmask 7168
        %v489 = vsel %vm488, %v479, %v485
        %v490 = vsel %vm488, %v481, %v487
        %p491 = scmp.eq.s32.totalorder %s21, 0
        // Predicated region
        $region115: #{se_conv1d.3} parent=105 // pred_check
          %p492 = pneg %p491
        $region116: #{se_conv1d.3} parent=105 // pred_check_branch
          %494 = sbr.rel (%p492) target = $region118
        $region117: #{se_conv1d.3} parent=105 // pred_region
          %vm495 = vcmask 15360
          %496 = vst.msk [vmem:[%s356] sm:$0xff] %vm495, %v489
          %497 = vst.msk [vmem:[%s356 + $0x8] sm:$0xff] %vm495, %v490
        $region118: #{se_conv1d.3} parent=105 // pred_fallthru
          _
        %p498 = scmp.gt.s32.totalorder %s21, 0
        // Predicated region
        $region119: #{se_conv1d.3} parent=105 // pred_check
          %p499 = pneg %p498
        $region120: #{se_conv1d.3} parent=105 // pred_check_branch
          %501 = sbr.rel (%p499) target = $region122
        $region121: #{se_conv1d.3} parent=105 // pred_region
          %v502 = vld [vmem:[%s356] sm:$0xff]
          %v503 = vld [vmem:[%s356 + $0x8] sm:$0xff]
          %v504 = vadd.f32 %v502, %v489
          %v505 = vadd.f32 %v503, %v490
          %vm506 = vcmask 15360
          %507 = vst.msk [vmem:[%s356] sm:$0xff] %vm506, %v504
          %508 = vst.msk [vmem:[%s356 + $0x8] sm:$0xff] %vm506, %v505
        $region122: #{se_conv1d.3} parent=105 // pred_fallthru
          _
        %p509 = scmp.lt.s32.totalorder %s20, 1
        %s510 = scalar_select %p509, %s20, 1
        %p511 = scmp.lt.s32.totalorder %s21, 0
        %s512 = scalar_select %p511, %s21, 0
        %s513 = smul.addr %s510, 2
        %s514 = sadd.s32 %s512, %s513
        %s515 = smul.addr %s514, 4
        %s516 = scalar_lea.vmem %s3, %s515
        %p517 = scmp.lt.s32.totalorder %s20, 1
        %s518 = scalar_select %p517, %s20, 1
        %s519 = smul.addr %s518, 2
        %s520 = smul.addr %s519, 8
        %s521 = scalar_lea.vmem %s4, %s520
        // Predicated region
        $region123: #{se_conv1d.3} parent=105 // pred_check
          %p522 = pneg %p127
        $region124: #{se_conv1d.3} parent=105 // pred_check_branch
          %524 = sbr.rel (%p522) target = $region126
        $region125: #{se_conv1d.3} parent=105 // pred_region
          _
        $region126: #{se_conv1d.3} parent=105 // pred_fallthru
          _
        // Predicated region
        $region127: #{se_conv1d.3} parent=105 // pred_check
          %p525 = pneg %p153
        $region128: #{se_conv1d.3} parent=105 // pred_check_branch
          %527 = sbr.rel (%p525) target = $region130
        $region129: #{se_conv1d.3} parent=105 // pred_region
          _
        $region130: #{se_conv1d.3} parent=105 // pred_fallthru
          _
      $region106: #{se_conv1d.3} parent=5 // pred_fallthru
        _
      %p528 = scmp.le.s32.totalorder 2, %s11
      // Predicated region
      $region131: #{se_conv1d.3} parent=5 // pred_check
        %p529 = pneg %p528
      $region132: #{se_conv1d.3} parent=5 // pred_check_branch
        %531 = sbr.rel (%p529) target = $region134
      $region133: #{se_conv1d.3} parent=5 // pred_region
        %s532 = ssub.s32 %s11, 2
        // Predicated region
        $region135: #{se_conv1d.3} parent=133 // pred_check
          %p533 = pneg %p133
        $region136: #{se_conv1d.3} parent=133 // pred_check_branch
          %535 = sbr.rel (%p533) target = $region138
        $region137: #{se_conv1d.3} parent=133 // pred_region
          %p536 = scmp.lt.s32.totalorder %s22, 1
          %s537 = scalar_select %p536, %s22, 1
          %p538 = scmp.lt.s32.totalorder %s23, 0
          %s539 = scalar_select %p538, %s23, 0
          %s540 = smul.addr %s537, 2
          %s541 = sadd.s32 %s539, %s540
          %s542 = smul.addr %s541, 4
          %s543 = scalar_lea.vmem %s3, %s542
        $region138: #{se_conv1d.3} parent=133 // pred_fallthru
          _
        // Predicated region
        $region139: #{se_conv1d.3} parent=133 // pred_check
          %p544 = pneg %p159
        $region140: #{se_conv1d.3} parent=133 // pred_check_branch
          %546 = sbr.rel (%p544) target = $region142
        $region141: #{se_conv1d.3} parent=133 // pred_region
          %p547 = scmp.lt.s32.totalorder %s22, 1
          %s548 = scalar_select %p547, %s22, 1
          %s549 = smul.addr %s548, 2
          %s550 = smul.addr %s549, 8
          %s551 = scalar_lea.vmem %s4, %s550
        $region142: #{se_conv1d.3} parent=133 // pred_fallthru
          _
      $region134: #{se_conv1d.3} parent=5 // pred_fallthru
        _
    $region6: #{se_conv1d.3} parent=1 // loop_footer
      %s15 = sadd.s32 1, %s11
    $region7: #{se_conv1d.3} parent=1 // loop_footer_branch
      %10 = sbr.rel target = $region3
    $region8: #{se_conv1d.3} parent=1 // loop_exit
      _

</llo_original>
